<compile_context>
chip_gen: v5e
topology: v5e:2x2
jax: 0.10.0
libtpu: 0.0.40
codegen_flags: <defaults>
</compile_context>

<pallas_src>
import functools

import jax
import jax.numpy as jnp
from jax import lax
from jax.experimental import pallas as pl
from jax.experimental.pallas import tpu as pltpu


def _esamb_kernel(x_ref, y_ref, w_ref, wkv_ref, wr_ref, aux_ref, mask_ref,
                  alpha_ref, out_ref, tap_ref, *, width):
    b_blk, cin, hw = x_ref.shape
    cout = out_ref.shape[1]
    kc = wkv_ref.shape[0] // 2
    p = b_blk * hw                       # lane-concatenated spatial extent
    w = width

    # --- FeatureFusion 'skip_sub' mix, images lane-concatenated -> (Cin, B*HW)
    # (f32 elementwise: tiny, and v5e has no bf16 VALU; bf16 only at the MXU.)
    mix = []
    for b in range(b_blk):
        xb = x_ref[b].astype(jnp.float32)
        yb = y_ref[b].astype(jnp.float32)
        mix.append((xb - yb) + xb * yb)
    mixed = mix[0] if b_blk == 1 else jnp.concatenate(mix, axis=1)   # (Cin, P)

    # --- 3x3 'SAME' conv: 9 static lane rolls (XLU) + precomputed edge/wrap
    # masks, stacked into a bf16 scratch and contracted with ONE MXU matmul.
    for ky in range(3):
        for kx in range(3):
            t = ky * 3 + kx
            off = (ky - 1) * w + (kx - 1)
            if off == 0:
                tap = mixed                                   # centre tap: no shift/mask
            else:
                tap = pltpu.roll(mixed, shift=(-off) % p, axis=1)
                tap = tap * mask_ref[t:t + 1, :]              # zero invalid / wrapped cols
            tap_ref[pl.ds(t * cin, cin), :] = tap.astype(jnp.bfloat16)

    z = jnp.dot(w_ref[...], tap_ref[...],
                preferred_element_type=jnp.float32)           # (Cout, P) f32 acc
    z = z + aux_ref[:, 0:1]                                   # conv bias

    # --- PReLU (single shared parameter, scalar read from SMEM)
    alpha = alpha_ref[0]
    z = jnp.where(z >= 0.0, z, alpha * z)

    # --- per-image InstanceNorm2d (affine=False, eps=1e-5); HW is a multiple of
    # 128 so each per-image slice is lane-tile aligned (no relayout).
    inv_n = 1.0 / hw
    zn_segs = []
    for b in range(b_blk):
        seg = z[:, b * hw:(b + 1) * hw]
        mean = jnp.sum(seg, axis=1, keepdims=True) * inv_n
        ex2 = jnp.sum(seg * seg, axis=1, keepdims=True) * inv_n
        var = jnp.maximum(ex2 - mean * mean, 0.0)             # clamp: no negative var
        zn_segs.append((seg - mean) * lax.rsqrt(var + 1e-5))
    zn = zn_segs[0] if b_blk == 1 else jnp.concatenate(zn_segs, axis=1)

    # --- efficient attention: keys & values 1x1 convs as one stacked bf16
    # matmul over all B*HW lanes; per-image softmax stats; rank-1 reprojection.
    kv = jnp.dot(wkv_ref[...], zn.astype(jnp.bfloat16),
                 preferred_element_type=jnp.float32)          # (2KC, P)
    for b in range(b_blk):
        keys = kv[:kc, b * hw:(b + 1) * hw]
        vals = kv[kc:, b * hw:(b + 1) * hw]
        kmax = jnp.max(keys, axis=1, keepdims=True)
        ke = jnp.exp(keys - kmax)
        num = jnp.sum(ke * vals, axis=1, keepdims=True)       # (KC, 1)
        den = jnp.sum(ke, axis=1, keepdims=True)
        ctx = (num * pl.reciprocal(den, approx=True)).astype(jnp.bfloat16)
        # query softmax over a size-1 head dim == 1 -> attended is rank-1 along
        # space; value/reprojection biases were folded into aux[:, 1].
        rep = jnp.dot(wr_ref[...], ctx,
                      preferred_element_type=jnp.float32) + aux_ref[:, 1:2]
        out_ref[b] = zn_segs[b] + rep


def _pick_batch_block(n: int, max_block: int = 8) -> int:
    """Largest divisor of n that keeps >=2 grid steps (v7x: 2 TensorCores)."""
    best = 1
    for b in range(1, min(n, max_block) + 1):
        if n % b == 0 and (n // b) >= 2:
            best = b
    return best


def esamb_forward(x, y, params, *, batch_block=None):
    N, Cin, H, W = x.shape
    HW = H * W
    w_mix = params["w_mix"]                      # (Cout, Cin, 3, 3)
    Cout = w_mix.shape[0]
    KC = params["wk"].shape[0]

    B = _pick_batch_block(N) if batch_block is None else batch_block
    assert N % B == 0, "batch block must divide N"

    # Activations are streamed in the caller's dtype (pass bf16 from the
    # upstream producer to halve HBM reads; a wrapper-side cast would just add
    # an extra HBM pass).  All kernel statistics stay f32.
    xr = x.reshape(N, Cin, HW)
    yr = y.reshape(N, Cin, HW)

    # conv weight flattened so column == tap*Cin + cin (matches the in-kernel
    # tap stack); bf16 operands for the MXU.
    wflat = jnp.transpose(w_mix, (0, 2, 3, 1)).reshape(Cout, 9 * Cin)
    wflat = wflat.astype(jnp.bfloat16)

    # exact rewrites: key bias is a no-op under the spatial softmax; value bias
    # folds through sum(softmax)==1 into wr@bv.  Pack with the conv bias.
    rep_bias = params["wr"] @ params["bv"] + params["br"]                 # (Cout,)
    aux = jnp.stack([params["b_mix"], rep_bias], axis=1).astype(jnp.float32)

    alpha = jnp.reshape(params["alpha"], (1,)).astype(jnp.float32)        # SMEM scalar

    wkv = jnp.concatenate([params["wk"], params["wv"]], axis=0).astype(jnp.bfloat16)
    wr = params["wr"].astype(jnp.bfloat16)

    # per-tap validity masks: zero positions whose 3x3 neighbour falls outside
    # the image (also kills the circular wrap of the flat-axis rolls, including
    # across lane-concatenated image boundaries).  Tiled over the B images.
    pos = jnp.arange(HW, dtype=jnp.int32)
    hh, ww = pos // W, pos % W
    rows = []
    for ky in range(3):
        for kx in range(3):
            dy, dx = ky - 1, kx - 1
            ok = (hh + dy >= 0) & (hh + dy < H) & (ww + dx >= 0) & (ww + dx < W)
            rows.append(ok)
    mask = jnp.tile(jnp.stack(rows, axis=0).astype(jnp.float32), (1, B))  # (9, B*HW)

    kernel = functools.partial(_esamb_kernel, width=W)
    out = pl.pallas_call(
        kernel,
        # output kept f32 to preserve module semantics; flip to bf16 if the
        # consumer accepts it (halves writeback).
        out_shape=jax.ShapeDtypeStruct((N, Cout, HW), jnp.float32),
        grid_spec=pltpu.PrefetchScalarGridSpec(
            num_scalar_prefetch=0,
            grid=(N // B,),
            in_specs=[
                pl.BlockSpec((B, Cin, HW), lambda n: (n, 0, 0)),      # x (producer dtype)
                pl.BlockSpec((B, Cin, HW), lambda n: (n, 0, 0)),      # y
                pl.BlockSpec((Cout, 9 * Cin), lambda n: (0, 0)),      # conv taps (bf16)
                pl.BlockSpec((2 * KC, Cout), lambda n: (0, 0)),       # [wk; wv] (bf16)
                pl.BlockSpec((Cout, KC), lambda n: (0, 0)),           # wr (bf16)
                pl.BlockSpec((Cout, 2), lambda n: (0, 0)),            # [conv bias | fused rep bias]
                pl.BlockSpec((9, B * HW), lambda n: (0, 0)),          # per-tap edge masks
                pl.BlockSpec(memory_space=pltpu.MemorySpace.SMEM),    # PReLU alpha scalar
            ],
            out_specs=pl.BlockSpec((B, Cout, HW), lambda n: (n, 0, 0)),
            scratch_shapes=[pltpu.VMEM((9 * Cin, B * HW), jnp.bfloat16)],   # tap stack
        ),
        compiler_params=pltpu.CompilerParams(dimension_semantics=("parallel",)),
    )(xr, yr, wflat, wkv, wr, aux, mask, alpha)
    return out.reshape(N, Cout, H, W)


def esamb_reference(x, y, params):
    """Pure-JAX (f32) reference of the PyTorch forward."""
    w_mix, b_mix, alpha = params["w_mix"], params["b_mix"], params["alpha"]
    mixed = (x - y) + x * y
    z = lax.conv_general_dilated(mixed, w_mix, (1, 1), "SAME",
                                 dimension_numbers=("NCHW", "OIHW", "NCHW"))
    z = z + b_mix[None, :, None, None]
    z = jnp.where(z >= 0.0, z, alpha * z)
    mean = jnp.mean(z, axis=(2, 3), keepdims=True)
    var = jnp.mean((z - mean) ** 2, axis=(2, 3), keepdims=True)
    z = (z - mean) / jnp.sqrt(var + 1e-5)
    n, c, h, w = z.shape
    zf = z.reshape(n, c, h * w)
    keys = jnp.einsum("kc,ncs->nks", params["wk"], zf) + params["bk"][None, :, None]
    values = jnp.einsum("kc,ncs->nks", params["wv"], zf) + params["bv"][None, :, None]
    ksm = jax.nn.softmax(keys, axis=2)
    context = jnp.sum(ksm * values, axis=2, keepdims=True)     # (n, KC, 1)
    attended = jnp.broadcast_to(context, values.shape)         # query softmax == 1
    rep = jnp.einsum("ok,nks->nos", params["wr"], attended) + params["br"][None, :, None]
    return (rep + zf).reshape(n, c, h, w)


def init_params(key, ch_in, ch_out, first_mix=False):
    cin = ch_in // 2
    kc = 2 if first_mix else (ch_out + 1) // 4   # key/value/head count; head width == 1
    ks = jax.random.split(key, 10)
    return {
        "w_mix": 0.1 * jax.random.normal(ks[0], (ch_out, cin, 3, 3), jnp.float32),
        "b_mix": 0.05 * jax.random.normal(ks[1], (ch_out,), jnp.float32),
        "alpha": jnp.asarray(0.25, jnp.float32),          # PReLU default init
        "wk": 0.1 * jax.random.normal(ks[2], (kc, ch_out), jnp.float32),
        "bk": 0.05 * jax.random.normal(ks[3], (kc,), jnp.float32),
        "wq": 0.1 * jax.random.normal(ks[4], (kc, ch_out), jnp.float32),
        "bq": 0.05 * jax.random.normal(ks[5], (kc,), jnp.float32),
        "wv": 0.1 * jax.random.normal(ks[6], (kc, ch_out), jnp.float32),
        "bv": 0.05 * jax.random.normal(ks[7], (kc,), jnp.float32),
        "wr": 0.1 * jax.random.normal(ks[8], (ch_out, kc), jnp.float32),
        "br": 0.05 * jax.random.normal(ks[9], (ch_out,), jnp.float32),
    }


if __name__ == "__main__":
    key = jax.random.PRNGKey(0)
    kx_, ky_, kp = jax.random.split(key, 3)
    # N=4 -> batch block B=2 per grid step and 2 grid steps (exercises the
    # batched path and keeps both v7x TensorCores busy).
    N, ch_in, ch_out, H, W = 4, 8, 8, 16, 16          # x, y have ch_in // 2 channels
    x32 = jax.random.normal(kx_, (N, ch_in // 2, H, W), jnp.float32)
    y32 = jax.random.normal(ky_, (N, ch_in // 2, H, W), jnp.float32)
    params = init_params(kp, ch_in, ch_out, first_mix=False)

    # The upstream producer is assumed to emit bf16 activations; the kernel
    # streams them as-is (no wrapper-side cast pass).
    x = x32.astype(jnp.bfloat16)
    y = y32.astype(jnp.bfloat16)

    out = esamb_forward(x, y, params)
    out = jax.block_until_ready(out)

    ref = esamb_reference(x.astype(jnp.float32), y.astype(jnp.float32), params)

    assert out.shape == (N, ch_out, H, W)
    # bf16 MXU operands (taps / weights, per the perf review) + approx
    # reciprocal add ~1e-2 absolute noise on unit-scale outputs; any structural
    # bug (wrong tap shift/mask, wrong stats) shows up as O(1) error.
    err = float(jnp.max(jnp.abs(out - ref)))
    assert jnp.allclose(out, ref, atol=2e-2, rtol=2e-2), err
    print("KERNEL_OK")
</pallas_src>

<mosaic_0001>
module attributes {stable_mosaic.version = 11 : i64} {
  func.func @_esamb_kernel(%arg0: i32, %arg1: memref<2x4x256xbf16, #tpu.memory_space<vmem>>, %arg2: memref<2x4x256xbf16, #tpu.memory_space<vmem>>, %arg3: memref<8x36xbf16, #tpu.memory_space<vmem>>, %arg4: memref<4x8xbf16, #tpu.memory_space<vmem>>, %arg5: memref<8x2xbf16, #tpu.memory_space<vmem>>, %arg6: memref<8x2xf32, #tpu.memory_space<vmem>>, %arg7: memref<9x512xf32, #tpu.memory_space<vmem>>, %arg8: memref<1xf32, #tpu.memory_space<smem>>, %arg9: memref<2x8x256xf32, #tpu.memory_space<vmem>>, %arg10: memref<36x512xbf16, #tpu.memory_space<vmem>>) attributes {dimension_semantics = [#tpu.dimension_semantics<parallel>], iteration_bounds = array<i64: 2>, scalar_prefetch = 0 : i64, scratch_operands = 1 : i64, tpu.core_type = #tpu.core_type<tc>, window_params = [{transform_indices = @transform_0, window_bounds = array<i64: 2, 4, 256>}, {transform_indices = @transform_1, window_bounds = array<i64: 2, 4, 256>}, {pipeline_mode = #tpu.pipeline_mode<synchronous>, transform_indices = @transform_2, window_bounds = array<i64: 8, 36>}, {pipeline_mode = #tpu.pipeline_mode<synchronous>, transform_indices = @transform_3, window_bounds = array<i64: 4, 8>}, {pipeline_mode = #tpu.pipeline_mode<synchronous>, transform_indices = @transform_4, window_bounds = array<i64: 8, 2>}, {pipeline_mode = #tpu.pipeline_mode<synchronous>, transform_indices = @transform_5, window_bounds = array<i64: 8, 2>}, {pipeline_mode = #tpu.pipeline_mode<synchronous>, transform_indices = @transform_6, window_bounds = array<i64: 9, 512>}, {transform_indices = @transform_7, window_bounds = array<i64: 1>}, {transform_indices = @transform_8, window_bounds = array<i64: 2, 8, 256>}]} {
    %c0 = arith.constant 0 : index
    %c0_0 = arith.constant 0 : index
    %c0_1 = arith.constant 0 : index
    %0 = vector.load %arg1[%c0, %c0_0, %c0_1] : memref<2x4x256xbf16, #tpu.memory_space<vmem>>, vector<1x4x256xbf16>
    %1 = vector.shape_cast %0 : vector<1x4x256xbf16> to vector<4x256xbf16>
    %2 = arith.extf %1 : vector<4x256xbf16> to vector<4x256xf32>
    %c0_2 = arith.constant 0 : index
    %c0_3 = arith.constant 0 : index
    %c0_4 = arith.constant 0 : index
    %3 = vector.load %arg2[%c0_2, %c0_3, %c0_4] : memref<2x4x256xbf16, #tpu.memory_space<vmem>>, vector<1x4x256xbf16>
    %4 = vector.shape_cast %3 : vector<1x4x256xbf16> to vector<4x256xbf16>
    %5 = arith.extf %4 : vector<4x256xbf16> to vector<4x256xf32>
    %6 = arith.subf %2, %5 : vector<4x256xf32>
    %7 = arith.mulf %2, %5 : vector<4x256xf32>
    %8 = arith.addf %6, %7 : vector<4x256xf32>
    %c1 = arith.constant 1 : index
    %c0_5 = arith.constant 0 : index
    %c0_6 = arith.constant 0 : index
    %9 = vector.load %arg1[%c1, %c0_5, %c0_6] : memref<2x4x256xbf16, #tpu.memory_space<vmem>>, vector<1x4x256xbf16>
    %10 = vector.shape_cast %9 : vector<1x4x256xbf16> to vector<4x256xbf16>
    %11 = arith.extf %10 : vector<4x256xbf16> to vector<4x256xf32>
    %c1_7 = arith.constant 1 : index
    %c0_8 = arith.constant 0 : index
    %c0_9 = arith.constant 0 : index
    %12 = vector.load %arg2[%c1_7, %c0_8, %c0_9] : memref<2x4x256xbf16, #tpu.memory_space<vmem>>, vector<1x4x256xbf16>
    %13 = vector.shape_cast %12 : vector<1x4x256xbf16> to vector<4x256xbf16>
    %14 = arith.extf %13 : vector<4x256xbf16> to vector<4x256xf32>
    %15 = arith.subf %11, %14 : vector<4x256xf32>
    %16 = arith.mulf %11, %14 : vector<4x256xf32>
    %17 = arith.addf %15, %16 : vector<4x256xf32>
    %18 = tpu.concatenate %8, %17 in 1 : vector<4x256xf32>, vector<4x256xf32> -> vector<4x512xf32>
    %c17_i32 = arith.constant 17 : i32
    %19 = tpu.dynamic_rotate %18 by %c17_i32 dim 1 : vector<4x512xf32>, i32 -> vector<4x512xf32>
    %c0_10 = arith.constant 0 : index
    %c0_11 = arith.constant 0 : index
    %20 = vector.load %arg7[%c0_10, %c0_11] : memref<9x512xf32, #tpu.memory_space<vmem>>, vector<1x512xf32>
    %21 = vector.broadcast %20 : vector<1x512xf32> to vector<4x512xf32>
    %22 = arith.mulf %19, %21 : vector<4x512xf32>
    %23 = arith.truncf %22 : vector<4x512xf32> to vector<4x512xbf16>
    %c0_12 = arith.constant 0 : index
    %c0_13 = arith.constant 0 : index
    %24 = vector.load %arg10[%c0_12, %c0_13] : memref<36x512xbf16, #tpu.memory_space<vmem>>, vector<4x512xbf16>
    tpu.vector_store %arg10[%c0_12, %c0_13], %23 {strides = array<i32>} : memref<36x512xbf16, #tpu.memory_space<vmem>>, vector<4x512xbf16>,
    %c16_i32 = arith.constant 16 : i32
    %25 = tpu.dynamic_rotate %18 by %c16_i32 dim 1 : vector<4x512xf32>, i32 -> vector<4x512xf32>
    %c1_14 = arith.constant 1 : index
    %c0_15 = arith.constant 0 : index
    %26 = vector.load %arg7[%c1_14, %c0_15] : memref<9x512xf32, #tpu.memory_space<vmem>>, vector<1x512xf32>
    %27 = vector.broadcast %26 : vector<1x512xf32> to vector<4x512xf32>
    %28 = arith.mulf %25, %27 : vector<4x512xf32>
    %29 = arith.truncf %28 : vector<4x512xf32> to vector<4x512xbf16>
    %c4 = arith.constant 4 : index
    %c0_16 = arith.constant 0 : index
    %30 = vector.load %arg10[%c4, %c0_16] : memref<36x512xbf16, #tpu.memory_space<vmem>>, vector<4x512xbf16>
    tpu.vector_store %arg10[%c4, %c0_16], %29 {strides = array<i32>} : memref<36x512xbf16, #tpu.memory_space<vmem>>, vector<4x512xbf16>,
    %c15_i32 = arith.constant 15 : i32
    %31 = tpu.dynamic_rotate %18 by %c15_i32 dim 1 : vector<4x512xf32>, i32 -> vector<4x512xf32>
    %c2 = arith.constant 2 : index
    %c0_17 = arith.constant 0 : index
    %32 = vector.load %arg7[%c2, %c0_17] : memref<9x512xf32, #tpu.memory_space<vmem>>, vector<1x512xf32>
    %33 = vector.broadcast %32 : vector<1x512xf32> to vector<4x512xf32>
    %34 = arith.mulf %31, %33 : vector<4x512xf32>
    %35 = arith.truncf %34 : vector<4x512xf32> to vector<4x512xbf16>
    %c8 = arith.constant 8 : index
    %c0_18 = arith.constant 0 : index
    %36 = vector.load %arg10[%c8, %c0_18] : memref<36x512xbf16, #tpu.memory_space<vmem>>, vector<4x512xbf16>
    tpu.vector_store %arg10[%c8, %c0_18], %35 {strides = array<i32>} : memref<36x512xbf16, #tpu.memory_space<vmem>>, vector<4x512xbf16>,
    %c1_i32 = arith.constant 1 : i32
    %37 = tpu.dynamic_rotate %18 by %c1_i32 dim 1 : vector<4x512xf32>, i32 -> vector<4x512xf32>
    %c3 = arith.constant 3 : index
    %c0_19 = arith.constant 0 : index
    %38 = vector.load %arg7[%c3, %c0_19] : memref<9x512xf32, #tpu.memory_space<vmem>>, vector<1x512xf32>
    %39 = vector.broadcast %38 : vector<1x512xf32> to vector<4x512xf32>
    %40 = arith.mulf %37, %39 : vector<4x512xf32>
    %41 = arith.truncf %40 : vector<4x512xf32> to vector<4x512xbf16>
    %c12 = arith.constant 12 : index
    %c0_20 = arith.constant 0 : index
    %42 = vector.load %arg10[%c12, %c0_20] : memref<36x512xbf16, #tpu.memory_space<vmem>>, vector<4x512xbf16>
    tpu.vector_store %arg10[%c12, %c0_20], %41 {strides = array<i32>} : memref<36x512xbf16, #tpu.memory_space<vmem>>, vector<4x512xbf16>,
    %43 = arith.truncf %18 : vector<4x512xf32> to vector<4x512xbf16>
    %c16 = arith.constant 16 : index
    %c0_21 = arith.constant 0 : index
    %44 = vector.load %arg10[%c16, %c0_21] : memref<36x512xbf16, #tpu.memory_space<vmem>>, vector<4x512xbf16>
    tpu.vector_store %arg10[%c16, %c0_21], %43 {strides = array<i32>} : memref<36x512xbf16, #tpu.memory_space<vmem>>, vector<4x512xbf16>,
    %c511_i32 = arith.constant 511 : i32
    %45 = tpu.dynamic_rotate %18 by %c511_i32 dim 1 : vector<4x512xf32>, i32 -> vector<4x512xf32>
    %c5 = arith.constant 5 : index
    %c0_22 = arith.constant 0 : index
    %46 = vector.load %arg7[%c5, %c0_22] : memref<9x512xf32, #tpu.memory_space<vmem>>, vector<1x512xf32>
    %47 = vector.broadcast %46 : vector<1x512xf32> to vector<4x512xf32>
    %48 = arith.mulf %45, %47 : vector<4x512xf32>
    %49 = arith.truncf %48 : vector<4x512xf32> to vector<4x512xbf16>
    %c20 = arith.constant 20 : index
    %c0_23 = arith.constant 0 : index
    %50 = vector.load %arg10[%c20, %c0_23] : memref<36x512xbf16, #tpu.memory_space<vmem>>, vector<4x512xbf16>
    tpu.vector_store %arg10[%c20, %c0_23], %49 {strides = array<i32>} : memref<36x512xbf16, #tpu.memory_space<vmem>>, vector<4x512xbf16>,
    %c497_i32 = arith.constant 497 : i32
    %51 = tpu.dynamic_rotate %18 by %c497_i32 dim 1 : vector<4x512xf32>, i32 -> vector<4x512xf32>
    %c6 = arith.constant 6 : index
    %c0_24 = arith.constant 0 : index
    %52 = vector.load %arg7[%c6, %c0_24] : memref<9x512xf32, #tpu.memory_space<vmem>>, vector<1x512xf32>
    %53 = vector.broadcast %52 : vector<1x512xf32> to vector<4x512xf32>
    %54 = arith.mulf %51, %53 : vector<4x512xf32>
    %55 = arith.truncf %54 : vector<4x512xf32> to vector<4x512xbf16>
    %c24 = arith.constant 24 : index
    %c0_25 = arith.constant 0 : index
    %56 = vector.load %arg10[%c24, %c0_25] : memref<36x512xbf16, #tpu.memory_space<vmem>>, vector<4x512xbf16>
    tpu.vector_store %arg10[%c24, %c0_25], %55 {strides = array<i32>} : memref<36x512xbf16, #tpu.memory_space<vmem>>, vector<4x512xbf16>,
    %c496_i32 = arith.constant 496 : i32
    %57 = tpu.dynamic_rotate %18 by %c496_i32 dim 1 : vector<4x512xf32>, i32 -> vector<4x512xf32>
    %c7 = arith.constant 7 : index
    %c0_26 = arith.constant 0 : index
    %58 = vector.load %arg7[%c7, %c0_26] : memref<9x512xf32, #tpu.memory_space<vmem>>, vector<1x512xf32>
    %59 = vector.broadcast %58 : vector<1x512xf32> to vector<4x512xf32>
    %60 = arith.mulf %57, %59 : vector<4x512xf32>
    %61 = arith.truncf %60 : vector<4x512xf32> to vector<4x512xbf16>
    %c28 = arith.constant 28 : index
    %c0_27 = arith.constant 0 : index
    %62 = vector.load %arg10[%c28, %c0_27] : memref<36x512xbf16, #tpu.memory_space<vmem>>, vector<4x512xbf16>
    tpu.vector_store %arg10[%c28, %c0_27], %61 {strides = array<i32>} : memref<36x512xbf16, #tpu.memory_space<vmem>>, vector<4x512xbf16>,
    %c495_i32 = arith.constant 495 : i32
    %63 = tpu.dynamic_rotate %18 by %c495_i32 dim 1 : vector<4x512xf32>, i32 -> vector<4x512xf32>
    %c8_28 = arith.constant 8 : index
    %c0_29 = arith.constant 0 : index
    %64 = vector.load %arg7[%c8_28, %c0_29] : memref<9x512xf32, #tpu.memory_space<vmem>>, vector<1x512xf32>
    %65 = vector.broadcast %64 : vector<1x512xf32> to vector<4x512xf32>
    %66 = arith.mulf %63, %65 : vector<4x512xf32>
    %67 = arith.truncf %66 : vector<4x512xf32> to vector<4x512xbf16>
    %c32 = arith.constant 32 : index
    %c0_30 = arith.constant 0 : index
    %68 = vector.load %arg10[%c32, %c0_30] : memref<36x512xbf16, #tpu.memory_space<vmem>>, vector<4x512xbf16>
    tpu.vector_store %arg10[%c32, %c0_30], %67 {strides = array<i32>} : memref<36x512xbf16, #tpu.memory_space<vmem>>, vector<4x512xbf16>,
    %c0_31 = arith.constant 0 : index
    %c0_32 = arith.constant 0 : index
    %69 = vector.load %arg3[%c0_31, %c0_32] : memref<8x36xbf16, #tpu.memory_space<vmem>>, vector<8x36xbf16>
    %c0_33 = arith.constant 0 : index
    %c0_34 = arith.constant 0 : index
    %70 = vector.load %arg10[%c0_33, %c0_34] : memref<36x512xbf16, #tpu.memory_space<vmem>>, vector<36x512xbf16>
    %cst = arith.constant dense<0.000000e+00> : vector<8x512xf32>
    %71 = tpu.matmul %69, %70, %cst {dimension_numbers = #tpu.dot_dimension_numbers<[1], [0], [0], [1], [0, 0, 1, 1], [], []>} : vector<8x36xbf16>, vector<36x512xbf16>, vector<8x512xf32> -> vector<8x512xf32>
    %c0_35 = arith.constant 0 : index
    %c0_36 = arith.constant 0 : index
    %72 = vector.load %arg6[%c0_35, %c0_36] : memref<8x2xf32, #tpu.memory_space<vmem>>, vector<8x1xf32>
    %73 = vector.broadcast %72 : vector<8x1xf32> to vector<8x512xf32>
    %74 = arith.addf %71, %73 : vector<8x512xf32>
    %c0_37 = arith.constant 0 : index
    %75 = memref.load %arg8[%c0_37] : memref<1xf32, #tpu.memory_space<smem>>
    %cst_38 = arith.constant 0.000000e+00 : f32
    %76 = vector.broadcast %cst_38 : f32 to vector<8x512xf32>
    %77 = arith.cmpf oge, %74, %76 : vector<8x512xf32>
    %78 = vector.broadcast %75 : f32 to vector<8x512xf32>
    %79 = arith.mulf %78, %74 : vector<8x512xf32>
    %80 = arith.select %77, %74, %79 : vector<8x512xi1>, vector<8x512xf32>
    %81 = vector.extract_strided_slice %80 {offsets = [0, 0], sizes = [8, 256], strides = [1, 1]} : vector<8x512xf32> to vector<8x256xf32>
    %cst_39 = arith.constant dense<0.000000e+00> : vector<8xf32>
    %82 = vector.multi_reduction <add>, %81, %cst_39 [1] : vector<8x256xf32> to vector<8xf32>
    %83 = vector.shape_cast %82 : vector<8xf32> to vector<8x1xf32>
    %cst_40 = arith.constant 3.906250e-03 : f32
    %84 = vector.broadcast %cst_40 : f32 to vector<8x1xf32>
    %85 = arith.mulf %83, %84 : vector<8x1xf32>
    %86 = arith.mulf %81, %81 : vector<8x256xf32>
    %cst_41 = arith.constant dense<0.000000e+00> : vector<8xf32>
    %87 = vector.multi_reduction <add>, %86, %cst_41 [1] : vector<8x256xf32> to vector<8xf32>
    %88 = vector.shape_cast %87 : vector<8xf32> to vector<8x1xf32>
    %cst_42 = arith.constant 3.906250e-03 : f32
    %89 = vector.broadcast %cst_42 : f32 to vector<8x1xf32>
    %90 = arith.mulf %88, %89 : vector<8x1xf32>
    %91 = arith.mulf %85, %85 : vector<8x1xf32>
    %92 = arith.subf %90, %91 : vector<8x1xf32>
    %cst_43 = arith.constant 0.000000e+00 : f32
    %93 = vector.broadcast %cst_43 : f32 to vector<8x1xf32>
    %94 = arith.maximumf %92, %93 : vector<8x1xf32>
    %95 = vector.broadcast %85 : vector<8x1xf32> to vector<8x256xf32>
    %96 = arith.subf %81, %95 : vector<8x256xf32>
    %cst_44 = arith.constant 9.99999974E-6 : f32
    %97 = vector.broadcast %cst_44 : f32 to vector<8x1xf32>
    %98 = arith.addf %94, %97 : vector<8x1xf32>
    %99 = math.rsqrt %98 : vector<8x1xf32>
    %100 = vector.broadcast %99 : vector<8x1xf32> to vector<8x256xf32>
    %101 = arith.mulf %96, %100 : vector<8x256xf32>
    %102 = vector.extract_strided_slice %80 {offsets = [0, 256], sizes = [8, 256], strides = [1, 1]} : vector<8x512xf32> to vector<8x256xf32>
    %cst_45 = arith.constant dense<0.000000e+00> : vector<8xf32>
    %103 = vector.multi_reduction <add>, %102, %cst_45 [1] : vector<8x256xf32> to vector<8xf32>
    %104 = vector.shape_cast %103 : vector<8xf32> to vector<8x1xf32>
    %cst_46 = arith.constant 3.906250e-03 : f32
    %105 = vector.broadcast %cst_46 : f32 to vector<8x1xf32>
    %106 = arith.mulf %104, %105 : vector<8x1xf32>
    %107 = arith.mulf %102, %102 : vector<8x256xf32>
    %cst_47 = arith.constant dense<0.000000e+00> : vector<8xf32>
    %108 = vector.multi_reduction <add>, %107, %cst_47 [1] : vector<8x256xf32> to vector<8xf32>
    %109 = vector.shape_cast %108 : vector<8xf32> to vector<8x1xf32>
    %cst_48 = arith.constant 3.906250e-03 : f32
    %110 = vector.broadcast %cst_48 : f32 to vector<8x1xf32>
    %111 = arith.mulf %109, %110 : vector<8x1xf32>
    %112 = arith.mulf %106, %106 : vector<8x1xf32>
    %113 = arith.subf %111, %112 : vector<8x1xf32>
    %cst_49 = arith.constant 0.000000e+00 : f32
    %114 = vector.broadcast %cst_49 : f32 to vector<8x1xf32>
    %115 = arith.maximumf %113, %114 : vector<8x1xf32>
    %116 = vector.broadcast %106 : vector<8x1xf32> to vector<8x256xf32>
    %117 = arith.subf %102, %116 : vector<8x256xf32>
    %cst_50 = arith.constant 9.99999974E-6 : f32
    %118 = vector.broadcast %cst_50 : f32 to vector<8x1xf32>
    %119 = arith.addf %115, %118 : vector<8x1xf32>
    %120 = math.rsqrt %119 : vector<8x1xf32>
    %121 = vector.broadcast %120 : vector<8x1xf32> to vector<8x256xf32>
    %122 = arith.mulf %117, %121 : vector<8x256xf32>
    %123 = tpu.concatenate %101, %122 in 1 : vector<8x256xf32>, vector<8x256xf32> -> vector<8x512xf32>
    %c0_51 = arith.constant 0 : index
    %c0_52 = arith.constant 0 : index
    %124 = vector.load %arg4[%c0_51, %c0_52] : memref<4x8xbf16, #tpu.memory_space<vmem>>, vector<4x8xbf16>
    %125 = arith.truncf %123 : vector<8x512xf32> to vector<8x512xbf16>
    %cst_53 = arith.constant dense<0.000000e+00> : vector<4x512xf32>
    %126 = tpu.matmul %124, %125, %cst_53 {dimension_numbers = #tpu.dot_dimension_numbers<[1], [0], [0], [1], [0, 0, 1, 1], [], []>} : vector<4x8xbf16>, vector<8x512xbf16>, vector<4x512xf32> -> vector<4x512xf32>
    %127 = vector.extract_strided_slice %126 {offsets = [0, 0], sizes = [2, 256], strides = [1, 1]} : vector<4x512xf32> to vector<2x256xf32>
    %128 = vector.extract_strided_slice %126 {offsets = [2, 0], sizes = [2, 256], strides = [1, 1]} : vector<4x512xf32> to vector<2x256xf32>
    %cst_54 = arith.constant dense<0xFF800000> : vector<2xf32>
    %129 = vector.multi_reduction <maximumf>, %127, %cst_54 [1] : vector<2x256xf32> to vector<2xf32>
    %130 = vector.shape_cast %129 : vector<2xf32> to vector<2x1xf32>
    %131 = vector.broadcast %130 : vector<2x1xf32> to vector<2x256xf32>
    %132 = arith.subf %127, %131 : vector<2x256xf32>
    %133 = math.exp %132 : vector<2x256xf32>
    %134 = arith.mulf %133, %128 : vector<2x256xf32>
    %cst_55 = arith.constant dense<0.000000e+00> : vector<2xf32>
    %135 = vector.multi_reduction <add>, %134, %cst_55 [1] : vector<2x256xf32> to vector<2xf32>
    %136 = vector.shape_cast %135 : vector<2xf32> to vector<2x1xf32>
    %cst_56 = arith.constant dense<0.000000e+00> : vector<2xf32>
    %137 = vector.multi_reduction <add>, %133, %cst_56 [1] : vector<2x256xf32> to vector<2xf32>
    %138 = vector.shape_cast %137 : vector<2xf32> to vector<2x1xf32>
    %139 = tpu.reciprocal %138 {approx = true} : vector<2x1xf32> -> vector<2x1xf32>
    %140 = arith.mulf %136, %139 : vector<2x1xf32>
    %141 = arith.truncf %140 : vector<2x1xf32> to vector<2x1xbf16>
    %c0_57 = arith.constant 0 : index
    %c0_58 = arith.constant 0 : index
    %142 = vector.load %arg5[%c0_57, %c0_58] : memref<8x2xbf16, #tpu.memory_space<vmem>>, vector<8x2xbf16>
    %cst_59 = arith.constant dense<0.000000e+00> : vector<8x1xf32>
    %143 = tpu.matmul %142, %141, %cst_59 {dimension_numbers = #tpu.dot_dimension_numbers<[1], [0], [0], [1], [0, 0, 1, 1], [], []>} : vector<8x2xbf16>, vector<2x1xbf16>, vector<8x1xf32> -> vector<8x1xf32>
    %c0_60 = arith.constant 0 : index
    %c1_61 = arith.constant 1 : index
    %144 = vector.load %arg6[%c0_60, %c1_61] : memref<8x2xf32, #tpu.memory_space<vmem>>, vector<8x1xf32>
    %145 = arith.addf %143, %144 : vector<8x1xf32>
    %146 = vector.broadcast %145 : vector<8x1xf32> to vector<8x256xf32>
    %147 = arith.addf %101, %146 : vector<8x256xf32>
    %c0_62 = arith.constant 0 : index
    %c0_63 = arith.constant 0 : index
    %c0_64 = arith.constant 0 : index
    %148 = vector.load %arg9[%c0_62, %c0_63, %c0_64] : memref<2x8x256xf32, #tpu.memory_space<vmem>>, vector<1x8x256xf32>
    %149 = vector.shape_cast %148 : vector<1x8x256xf32> to vector<8x256xf32>
    %150 = vector.shape_cast %147 : vector<8x256xf32> to vector<1x8x256xf32>
    tpu.vector_store %arg9[%c0_62, %c0_63, %c0_64], %150 {strides = array<i32>} : memref<2x8x256xf32, #tpu.memory_space<vmem>>, vector<1x8x256xf32>,
    %151 = vector.extract_strided_slice %126 {offsets = [0, 256], sizes = [2, 256], strides = [1, 1]} : vector<4x512xf32> to vector<2x256xf32>
    %152 = vector.extract_strided_slice %126 {offsets = [2, 256], sizes = [2, 256], strides = [1, 1]} : vector<4x512xf32> to vector<2x256xf32>
    %cst_65 = arith.constant dense<0xFF800000> : vector<2xf32>
    %153 = vector.multi_reduction <maximumf>, %151, %cst_65 [1] : vector<2x256xf32> to vector<2xf32>
    %154 = vector.shape_cast %153 : vector<2xf32> to vector<2x1xf32>
    %155 = vector.broadcast %154 : vector<2x1xf32> to vector<2x256xf32>
    %156 = arith.subf %151, %155 : vector<2x256xf32>
    %157 = math.exp %156 : vector<2x256xf32>
    %158 = arith.mulf %157, %152 : vector<2x256xf32>
    %cst_66 = arith.constant dense<0.000000e+00> : vector<2xf32>
    %159 = vector.multi_reduction <add>, %158, %cst_66 [1] : vector<2x256xf32> to vector<2xf32>
    %160 = vector.shape_cast %159 : vector<2xf32> to vector<2x1xf32>
    %cst_67 = arith.constant dense<0.000000e+00> : vector<2xf32>
    %161 = vector.multi_reduction <add>, %157, %cst_67 [1] : vector<2x256xf32> to vector<2xf32>
    %162 = vector.shape_cast %161 : vector<2xf32> to vector<2x1xf32>
    %163 = tpu.reciprocal %162 {approx = true} : vector<2x1xf32> -> vector<2x1xf32>
    %164 = arith.mulf %160, %163 : vector<2x1xf32>
    %165 = arith.truncf %164 : vector<2x1xf32> to vector<2x1xbf16>
    %c0_68 = arith.constant 0 : index
    %c0_69 = arith.constant 0 : index
    %166 = vector.load %arg5[%c0_68, %c0_69] : memref<8x2xbf16, #tpu.memory_space<vmem>>, vector<8x2xbf16>
    %cst_70 = arith.constant dense<0.000000e+00> : vector<8x1xf32>
    %167 = tpu.matmul %166, %165, %cst_70 {dimension_numbers = #tpu.dot_dimension_numbers<[1], [0], [0], [1], [0, 0, 1, 1], [], []>} : vector<8x2xbf16>, vector<2x1xbf16>, vector<8x1xf32> -> vector<8x1xf32>
    %c0_71 = arith.constant 0 : index
    %c1_72 = arith.constant 1 : index
    %168 = vector.load %arg6[%c0_71, %c1_72] : memref<8x2xf32, #tpu.memory_space<vmem>>, vector<8x1xf32>
    %169 = arith.addf %167, %168 : vector<8x1xf32>
    %170 = vector.broadcast %169 : vector<8x1xf32> to vector<8x256xf32>
    %171 = arith.addf %122, %170 : vector<8x256xf32>
    %c1_73 = arith.constant 1 : index
    %c0_74 = arith.constant 0 : index
    %c0_75 = arith.constant 0 : index
    %172 = vector.load %arg9[%c1_73, %c0_74, %c0_75] : memref<2x8x256xf32, #tpu.memory_space<vmem>>, vector<1x8x256xf32>
    %173 = vector.shape_cast %172 : vector<1x8x256xf32> to vector<8x256xf32>
    %174 = vector.shape_cast %171 : vector<8x256xf32> to vector<1x8x256xf32>
    tpu.vector_store %arg9[%c1_73, %c0_74, %c0_75], %174 {strides = array<i32>} : memref<2x8x256xf32, #tpu.memory_space<vmem>>, vector<1x8x256xf32>,
    return
  }
  func.func @transform_0(%arg0: i32) -> (i32, i32, i32) {
    %c0_i32 = arith.constant 0 : i32
    %c0_i32_0 = arith.constant 0 : i32
    %c0_i32_1 = arith.constant 0 : i32
    return %arg0, %c0_i32, %c0_i32_0 : i32, i32, i32
  }
  func.func @transform_1(%arg0: i32) -> (i32, i32, i32) {
    %c0_i32 = arith.constant 0 : i32
    %c0_i32_0 = arith.constant 0 : i32
    %c0_i32_1 = arith.constant 0 : i32
    return %arg0, %c0_i32, %c0_i32_0 : i32, i32, i32
  }
  func.func @transform_2(%arg0: i32) -> (i32, i32) {
    %c0_i32 = arith.constant 0 : i32
    %c0_i32_0 = arith.constant 0 : i32
    %c0_i32_1 = arith.constant 0 : i32
    return %c0_i32, %c0_i32_0 : i32, i32
  }
  func.func @transform_3(%arg0: i32) -> (i32, i32) {
    %c0_i32 = arith.constant 0 : i32
    %c0_i32_0 = arith.constant 0 : i32
    %c0_i32_1 = arith.constant 0 : i32
    return %c0_i32, %c0_i32_0 : i32, i32
  }
  func.func @transform_4(%arg0: i32) -> (i32, i32) {
    %c0_i32 = arith.constant 0 : i32
    %c0_i32_0 = arith.constant 0 : i32
    %c0_i32_1 = arith.constant 0 : i32
    return %c0_i32, %c0_i32_0 : i32, i32
  }
  func.func @transform_5(%arg0: i32) -> (i32, i32) {
    %c0_i32 = arith.constant 0 : i32
    %c0_i32_0 = arith.constant 0 : i32
    %c0_i32_1 = arith.constant 0 : i32
    return %c0_i32, %c0_i32_0 : i32, i32
  }
  func.func @transform_6(%arg0: i32) -> (i32, i32) {
    %c0_i32 = arith.constant 0 : i32
    %c0_i32_0 = arith.constant 0 : i32
    %c0_i32_1 = arith.constant 0 : i32
    return %c0_i32, %c0_i32_0 : i32, i32
  }
  func.func @transform_7(%arg0: i32) -> i32 {
    %c0_i32 = arith.constant 0 : i32
    %c0_i32_0 = arith.constant 0 : i32
    return %c0_i32 : i32
  }
  func.func @transform_8(%arg0: i32) -> (i32, i32, i32) {
    %c0_i32 = arith.constant 0 : i32
    %c0_i32_0 = arith.constant 0 : i32
    %c0_i32_1 = arith.constant 0 : i32
    return %arg0, %c0_i32, %c0_i32_0 : i32, i32, i32
  }
}

</mosaic_0001>

<llo_original>
// kernel: tpu_custom_call.1
$region0: #{tpu_custom_call.1}
  #allocation0 [shape = 'u32[]', space=smem, size = 0x4, offset = 0x4, fixed_abs, tag = 'smem constant byte address 0x4 - core index']
  #allocation1 [shape = 'u32[72,128]{1,0:T(1,128)}', space=vmem, size = 0x9000, scoped, tag = 'internal scratch']
  #allocation2 [shape = 'bf16[36,512]{1,0:T(8,128)(2,1)}', space=vmem, size = 0xa000, scoped, tag = 'scratch operand']
  #allocation3 [shape = 'f32[1]{0:T(128)S(6)}', space=smem, size = 0x200, scoped, tag = 'scoped memory for tpu_custom_call.1']
  %s0 = inlined_call_operand.hbm [shape: bf16[4,4,256], index: 0, kind: input, shape index: {}]
  %s1 = inlined_call_operand.hbm [shape: bf16[4,4,256], index: 1, kind: input, shape index: {}]
  %s2 = inlined_call_operand.vmem [shape: bf16[8,36], index: 2, kind: input, shape index: {}]
  %s3 = inlined_call_operand.vmem [shape: bf16[4,8], index: 3, kind: input, shape index: {}]
  %s4 = inlined_call_operand.vmem [shape: bf16[8,2], index: 4, kind: input, shape index: {}]
  %s5 = inlined_call_operand.vmem [shape: f32[8,2], index: 5, kind: input, shape index: {}]
  %s6 = inlined_call_operand.hbm [shape: f32[9,512], index: 6, kind: input, shape index: {}]
  %s7 = inlined_call_operand.<no memory space> [shape: f32[1], index: 7, kind: input, shape index: {}]
  %s8 = inlined_call_operand.hbm [shape: f32[4,8,256], index: 8, kind: output, shape index: {}]
  %s9 = sld [smem:[#allocation0]]
  $region77: #{tpu_custom_call.1} parent=0
    _
  %s11 = ssub.s32 1, %s9
  %s12 = scalar_select 0, %s11, %s9
  %13 = sst [smem:[#allocation3]] %s7
  $region1: #{tpu_custom_call.1} parent=0
    #allocation4 [shape = 'u8[8192]{0}', space=vmem, size = 0x2000, scoped, tag = 'input window, operand 0']
    #allocation5 [shape = 's32[2]{0}', space=sflag, size = 0x8, scoped, tag = 'scoped memory for tpu_custom_call.1']
    #allocation6 [shape = 's32[2]{0}', space=sflag, size = 0x8, scoped, tag = 'scoped memory for tpu_custom_call.1']
    #allocation7 [shape = 'u8[8192]{0}', space=vmem, size = 0x2000, scoped, tag = 'input window, operand 1']
    #allocation8 [shape = 's32[2]{0}', space=sflag, size = 0x8, scoped, tag = 'scoped memory for tpu_custom_call.1']
    #allocation9 [shape = 'u8[32768]{0}', space=vmem, size = 0x8000, scoped, tag = 'input window, operand 6, single buffered']
    #allocation10 [shape = 'u8[32768]{0}', space=vmem, size = 0x8000, scoped, tag = 'output window, operand 0']
    %14 = vsyncpa [#allocation5], 0
    %s15 = scalar_lea.sflag [#allocation5], 1
    %16 = vsyncpa %s15, 0
    %17 = vsyncpa [#allocation8], 0
    %s18 = scalar_lea.sflag [#allocation8], 1
    %19 = vsyncpa %s18, 0
    %20 = vsyncpa [#allocation6], 0
    %s21 = scalar_lea.sflag [#allocation6], 1
    %22 = vsyncpa %s21, 0
    loop: start=0, step=1, limit=4
    $region2: #{tpu_custom_call.1} parent=1 // loop_pre_header
      _
    $region3: #{tpu_custom_call.1} parent=1 // loop_header
      %s24 = sphi 0, %s28
      %p25 = scmp.ge.s32.totalorder %s24, 4
      %s34 = sphi 0, %s36
      %s37 = sphi 0, %s34
      %s38 = sphi 0, %s37
      %s54 = sphi 0, %s38
      %s60 = sphi 0, %s62
      %s63 = sphi 0, %s60
      %s64 = sphi 0, %s63
      %s80 = sphi 0, %s64
      %s84 = sphi 0, %s84
      %s86 = sphi 0, %s84
      %s87 = sphi 0, %s86
      %s101 = sphi 0, %s87
      %s105 = sphi 0, %s105
      %s107 = sphi 0, %s105
      %s108 = sphi 0, %s107
      %s122 = sphi 0, %s108
      %s126 = sphi 0, %s126
      %s128 = sphi 0, %s126
      %s129 = sphi 0, %s128
      %s143 = sphi 0, %s129
      %s147 = sphi 0, %s147
      %s149 = sphi 0, %s147
      %s150 = sphi 0, %s149
      %s164 = sphi 0, %s150
      %s168 = sphi 0, %s168
      %s170 = sphi 0, %s168
      %s171 = sphi 0, %s170
      %s185 = sphi 0, %s171
      %s189 = sphi 0, %s189
      %s191 = sphi 0, %s189
      %s192 = sphi 0, %s191
      %s206 = sphi 0, %s192
      %s212 = sphi 0, %s214
      %s215 = sphi 0, %s212
      %s216 = sphi 0, %s215
      %s232 = sphi 0, %s216
    $region4: #{tpu_custom_call.1} parent=1 // loop_header_branch
      %27 = sbr.rel (%p25) target = $region8
    $region5: #{tpu_custom_call.1} parent=1 // loop_body
      %s29 = ssub.s32 %s24, 1
      %s30 = ssub.s32 %s24, 2
      %s31 = sadd.s32 %s24, 1
      %s32 = ssub.s32 %s24, %s31
      %p33 = scmp.eq.s32.totalorder %s32, 0
      %s35 = sadd.s32 %s34, 1
      %s36 = scalar_select %p33, %s34, %s35
      %p39 = pneg %p33
      %p40 = scmp.eq.s32.totalorder %s24, 1
      %p41 = por %p39, %p40
      %p42 = scmp.ne.s32.totalorder %s34, %s37
      %p43 = scmp.eq.s32.totalorder %s24, 0
      %p44 = por %p42, %p43
      %p45 = scmp.ne.s32.totalorder %s34, %s37
      %p46 = scmp.eq.s32.totalorder %s29, 1
      %p47 = por %p45, %p46
      %p48 = scmp.ne.s32.totalorder %s37, %s38
      %p49 = scmp.eq.s32.totalorder %s29, 0
      %p50 = por %p48, %p49
      %p51 = scmp.ne.s32.totalorder %s37, %s38
      %p52 = scmp.eq.s32.totalorder %s30, 1
      %p53 = por %p51, %p52
      %p55 = scmp.ne.s32.totalorder %s38, %s54
      %p56 = scmp.eq.s32.totalorder %s30, 0
      %p57 = por %p55, %p56
      %s58 = ssub.s32 %s24, %s31
      %p59 = scmp.eq.s32.totalorder %s58, 0
      %s61 = sadd.s32 %s60, 1
      %s62 = scalar_select %p59, %s60, %s61
      %p65 = pneg %p59
      %p66 = scmp.eq.s32.totalorder %s24, 1
      %p67 = por %p65, %p66
      %p68 = scmp.ne.s32.totalorder %s60, %s63
      %p69 = scmp.eq.s32.totalorder %s24, 0
      %p70 = por %p68, %p69
      %p71 = scmp.ne.s32.totalorder %s60, %s63
      %p72 = scmp.eq.s32.totalorder %s29, 1
      %p73 = por %p71, %p72
      %p74 = scmp.ne.s32.totalorder %s63, %s64
      %p75 = scmp.eq.s32.totalorder %s29, 0
      %p76 = por %p74, %p75
      %p77 = scmp.ne.s32.totalorder %s63, %s64
      %p78 = scmp.eq.s32.totalorder %s30, 1
      %p79 = por %p77, %p78
      %p81 = scmp.ne.s32.totalorder %s64, %s80
      %p82 = scmp.eq.s32.totalorder %s30, 0
      %p83 = por %p81, %p82
      %s85 = sadd.s32 %s84, 1
      %p88 = scmp.eq.s32.totalorder %s24, 1
      %p89 = scmp.ne.s32.totalorder %s84, %s86
      %p90 = scmp.eq.s32.totalorder %s24, 0
      %p91 = por %p89, %p90
      %p92 = scmp.ne.s32.totalorder %s84, %s86
      %p93 = scmp.eq.s32.totalorder %s29, 1
      %p94 = por %p92, %p93
      %p95 = scmp.ne.s32.totalorder %s86, %s87
      %p96 = scmp.eq.s32.totalorder %s29, 0
      %p97 = por %p95, %p96
      %p98 = scmp.ne.s32.totalorder %s86, %s87
      %p99 = scmp.eq.s32.totalorder %s30, 1
      %p100 = por %p98, %p99
      %p102 = scmp.ne.s32.totalorder %s87, %s101
      %p103 = scmp.eq.s32.totalorder %s30, 0
      %p104 = por %p102, %p103
      %s106 = sadd.s32 %s105, 1
      %p109 = scmp.eq.s32.totalorder %s24, 1
      %p110 = scmp.ne.s32.totalorder %s105, %s107
      %p111 = scmp.eq.s32.totalorder %s24, 0
      %p112 = por %p110, %p111
      %p113 = scmp.ne.s32.totalorder %s105, %s107
      %p114 = scmp.eq.s32.totalorder %s29, 1
      %p115 = por %p113, %p114
      %p116 = scmp.ne.s32.totalorder %s107, %s108
      %p117 = scmp.eq.s32.totalorder %s29, 0
      %p118 = por %p116, %p117
      %p119 = scmp.ne.s32.totalorder %s107, %s108
      %p120 = scmp.eq.s32.totalorder %s30, 1
      %p121 = por %p119, %p120
      %p123 = scmp.ne.s32.totalorder %s108, %s122
      %p124 = scmp.eq.s32.totalorder %s30, 0
      %p125 = por %p123, %p124
      %s127 = sadd.s32 %s126, 1
      %p130 = scmp.eq.s32.totalorder %s24, 1
      %p131 = scmp.ne.s32.totalorder %s126, %s128
      %p132 = scmp.eq.s32.totalorder %s24, 0
      %p133 = por %p131, %p132
      %p134 = scmp.ne.s32.totalorder %s126, %s128
      %p135 = scmp.eq.s32.totalorder %s29, 1
      %p136 = por %p134, %p135
      %p137 = scmp.ne.s32.totalorder %s128, %s129
      %p138 = scmp.eq.s32.totalorder %s29, 0
      %p139 = por %p137, %p138
      %p140 = scmp.ne.s32.totalorder %s128, %s129
      %p141 = scmp.eq.s32.totalorder %s30, 1
      %p142 = por %p140, %p141
      %p144 = scmp.ne.s32.totalorder %s129, %s143
      %p145 = scmp.eq.s32.totalorder %s30, 0
      %p146 = por %p144, %p145
      %s148 = sadd.s32 %s147, 1
      %p151 = scmp.eq.s32.totalorder %s24, 1
      %p152 = scmp.ne.s32.totalorder %s147, %s149
      %p153 = scmp.eq.s32.totalorder %s24, 0
      %p154 = por %p152, %p153
      %p155 = scmp.ne.s32.totalorder %s147, %s149
      %p156 = scmp.eq.s32.totalorder %s29, 1
      %p157 = por %p155, %p156
      %p158 = scmp.ne.s32.totalorder %s149, %s150
      %p159 = scmp.eq.s32.totalorder %s29, 0
      %p160 = por %p158, %p159
      %p161 = scmp.ne.s32.totalorder %s149, %s150
      %p162 = scmp.eq.s32.totalorder %s30, 1
      %p163 = por %p161, %p162
      %p165 = scmp.ne.s32.totalorder %s150, %s164
      %p166 = scmp.eq.s32.totalorder %s30, 0
      %p167 = por %p165, %p166
      %s169 = sadd.s32 %s168, 1
      %p172 = scmp.eq.s32.totalorder %s24, 1
      %p173 = scmp.ne.s32.totalorder %s168, %s170
      %p174 = scmp.eq.s32.totalorder %s24, 0
      %p175 = por %p173, %p174
      %p176 = scmp.ne.s32.totalorder %s168, %s170
      %p177 = scmp.eq.s32.totalorder %s29, 1
      %p178 = por %p176, %p177
      %p179 = scmp.ne.s32.totalorder %s170, %s171
      %p180 = scmp.eq.s32.totalorder %s29, 0
      %p181 = por %p179, %p180
      %p182 = scmp.ne.s32.totalorder %s170, %s171
      %p183 = scmp.eq.s32.totalorder %s30, 1
      %p184 = por %p182, %p183
      %p186 = scmp.ne.s32.totalorder %s171, %s185
      %p187 = scmp.eq.s32.totalorder %s30, 0
      %p188 = por %p186, %p187
      %s190 = sadd.s32 %s189, 1
      %p193 = scmp.eq.s32.totalorder %s24, 1
      %p194 = scmp.ne.s32.totalorder %s189, %s191
      %p195 = scmp.eq.s32.totalorder %s24, 0
      %p196 = por %p194, %p195
      %p197 = scmp.ne.s32.totalorder %s189, %s191
      %p198 = scmp.eq.s32.totalorder %s29, 1
      %p199 = por %p197, %p198
      %p200 = scmp.ne.s32.totalorder %s191, %s192
      %p201 = scmp.eq.s32.totalorder %s29, 0
      %p202 = por %p200, %p201
      %p203 = scmp.ne.s32.totalorder %s191, %s192
      %p204 = scmp.eq.s32.totalorder %s30, 1
      %p205 = por %p203, %p204
      %p207 = scmp.ne.s32.totalorder %s192, %s206
      %p208 = scmp.eq.s32.totalorder %s30, 0
      %p209 = por %p207, %p208
      %s210 = ssub.s32 %s24, %s31
      %p211 = scmp.eq.s32.totalorder %s210, 0
      %s213 = sadd.s32 %s212, 1
      %s214 = scalar_select %p211, %s212, %s213
      %p217 = pneg %p211
      %p218 = scmp.eq.s32.totalorder %s24, 1
      %p219 = por %p217, %p218
      %p220 = scmp.ne.s32.totalorder %s212, %s215
      %p221 = scmp.eq.s32.totalorder %s24, 0
      %p222 = por %p220, %p221
      %p223 = scmp.ne.s32.totalorder %s212, %s215
      %p224 = scmp.eq.s32.totalorder %s29, 1
      %p225 = por %p223, %p224
      %p226 = scmp.ne.s32.totalorder %s215, %s216
      %p227 = scmp.eq.s32.totalorder %s29, 0
      %p228 = por %p226, %p227
      %p229 = scmp.ne.s32.totalorder %s215, %s216
      %p230 = scmp.eq.s32.totalorder %s30, 1
      %p231 = por %p229, %p230
      %p233 = scmp.ne.s32.totalorder %s216, %s232
      %p234 = scmp.eq.s32.totalorder %s30, 0
      %p235 = por %p233, %p234
      %p236 = scmp.le.s32.totalorder 1, %s24
      %p237 = scmp.lt.s32.totalorder %s24, 3
      %p238 = pnand %p236, %p237
      %p239 = pneg %p238
      // Predicated region
      $region9: #{tpu_custom_call.1} parent=5 // pred_check
        _
      $region10: #{tpu_custom_call.1} parent=5 // pred_check_branch
        %241 = sbr.rel (%p238) target = $region12
      $region11: #{tpu_custom_call.1} parent=5 // pred_region
        %s242 = ssub.s32 %s24, 1
        // Predicated region
        $region13: #{tpu_custom_call.1} parent=11 // pred_check
          %p243 = pneg %p97
        $region14: #{tpu_custom_call.1} parent=11 // pred_check_branch
          %245 = sbr.rel (%p243) target = $region16
        $region15: #{tpu_custom_call.1} parent=11 // pred_region
          _
        $region16: #{tpu_custom_call.1} parent=11 // pred_fallthru
          _
        // Predicated region
        $region17: #{tpu_custom_call.1} parent=11 // pred_check
          %p246 = pneg %p118
        $region18: #{tpu_custom_call.1} parent=11 // pred_check_branch
          %248 = sbr.rel (%p246) target = $region20
        $region19: #{tpu_custom_call.1} parent=11 // pred_region
          _
        $region20: #{tpu_custom_call.1} parent=11 // pred_fallthru
          _
        // Predicated region
        $region21: #{tpu_custom_call.1} parent=11 // pred_check
          %p249 = pneg %p139
        $region22: #{tpu_custom_call.1} parent=11 // pred_check_branch
          %251 = sbr.rel (%p249) target = $region24
        $region23: #{tpu_custom_call.1} parent=11 // pred_region
          _
        $region24: #{tpu_custom_call.1} parent=11 // pred_fallthru
          _
        // Predicated region
        $region25: #{tpu_custom_call.1} parent=11 // pred_check
          %p252 = pneg %p160
        $region26: #{tpu_custom_call.1} parent=11 // pred_check_branch
          %254 = sbr.rel (%p252) target = $region28
        $region27: #{tpu_custom_call.1} parent=11 // pred_region
          _
        $region28: #{tpu_custom_call.1} parent=11 // pred_fallthru
          _
        // Predicated region
        $region29: #{tpu_custom_call.1} parent=11 // pred_check
          %p255 = pneg %p181
        $region30: #{tpu_custom_call.1} parent=11 // pred_check_branch
          %257 = sbr.rel (%p255) target = $region32
        $region31: #{tpu_custom_call.1} parent=11 // pred_region
          %259 = vsyncadd [#allocation8], 0
          %s260 = sshll.u32 %s6, 4
          %s261 = int_to_ptr.hbm [resolvable:$true] %s260
          %s262 = sshll.u32 [#allocation9], 4
          %s263 = int_to_ptr.vmem [resolvable:$true] %s262
          %268 = dma.hbm_to_vmem [thread:$0]  %s261, 1024, %s263, [#allocation8], 512, 512, 32
        $region32: #{tpu_custom_call.1} parent=11 // pred_fallthru
          _
        // Predicated region
        $region33: #{tpu_custom_call.1} parent=11 // pred_check
          %p269 = pneg %p202
        $region34: #{tpu_custom_call.1} parent=11 // pred_check_branch
          %271 = sbr.rel (%p269) target = $region36
        $region35: #{tpu_custom_call.1} parent=11 // pred_region
          _
        $region36: #{tpu_custom_call.1} parent=11 // pred_fallthru
          _
      $region12: #{tpu_custom_call.1} parent=5 // pred_fallthru
        _
      %p272 = scmp.lt.s32.totalorder %s24, 2
      // Predicated region
      $region37: #{tpu_custom_call.1} parent=5 // pred_check
        %p273 = pneg %p272
      $region38: #{tpu_custom_call.1} parent=5 // pred_check_branch
        %275 = sbr.rel (%p273) target = $region40
      $region39: #{tpu_custom_call.1} parent=5 // pred_region
        // Predicated region
        $region41: #{tpu_custom_call.1} parent=39 // pred_check
          %p276 = pneg %p44
        $region42: #{tpu_custom_call.1} parent=39 // pred_check_branch
          %278 = sbr.rel (%p276) target = $region44
        $region43: #{tpu_custom_call.1} parent=39 // pred_region
          %s279 = sand.u32 %s34, 1
          %s280 = scalar_lea.sflag [#allocation5], %s279
          %s281 = sand.u32 %s34, 1
          %s282 = smul.addr %s281, 8
          %s283 = scalar_lea.vmem [#allocation4], %s282
          %s284 = smul.u32 2, %s24
          %286 = vsyncadd %s280, 0
          %s287 = smul.addr %s284, 2
          %s288 = smul.addr %s287, 2
          %s289 = scalar_lea.hbm %s0, %s288
          %s290 = sshll.u32 %s289, 4
          %s291 = int_to_ptr.hbm [resolvable:$true] %s290
          %s292 = sshll.u32 %s283, 4
          %s293 = int_to_ptr.vmem [resolvable:$true] %s292
          %298 = dma.hbm_to_vmem [thread:$0]  %s291, 128, %s293, %s280, 64, 64, 4
        $region44: #{tpu_custom_call.1} parent=39 // pred_fallthru
          _
        // Predicated region
        $region45: #{tpu_custom_call.1} parent=39 // pred_check
          %p299 = pneg %p70
        $region46: #{tpu_custom_call.1} parent=39 // pred_check_branch
          %301 = sbr.rel (%p299) target = $region48
        $region47: #{tpu_custom_call.1} parent=39 // pred_region
          %s302 = sand.u32 %s24, 1
          %s303 = scalar_lea.sflag [#allocation8], %s302
          %s304 = sand.u32 %s60, 1
          %s305 = smul.addr %s304, 8
          %s306 = scalar_lea.vmem [#allocation7], %s305
          %s307 = smul.u32 2, %s24
          %309 = vsyncadd %s303, 0
          %s310 = smul.addr %s307, 2
          %s311 = smul.addr %s310, 2
          %s312 = scalar_lea.hbm %s1, %s311
          %s313 = sshll.u32 %s312, 4
          %s314 = int_to_ptr.hbm [resolvable:$true] %s313
          %s315 = sshll.u32 %s306, 4
          %s316 = int_to_ptr.vmem [resolvable:$true] %s315
          %321 = dma.hbm_to_vmem [thread:$0]  %s314, 128, %s316, %s303, 64, 64, 4
        $region48: #{tpu_custom_call.1} parent=39 // pred_fallthru
          _
      $region40: #{tpu_custom_call.1} parent=5 // pred_fallthru
        _
      %p322 = scmp.le.s32.totalorder 1, %s24
      %p323 = scmp.lt.s32.totalorder %s24, 3
      %p324 = pnand %p322, %p323
      %p325 = pneg %p324
      // Predicated region
      $region49: #{tpu_custom_call.1} parent=5 // pred_check
        _
      $region50: #{tpu_custom_call.1} parent=5 // pred_check_branch
        %327 = sbr.rel (%p324) target = $region52
      $region51: #{tpu_custom_call.1} parent=5 // pred_region
        %s328 = ssub.s32 %s24, 1
        %s329 = sand.u32 %s37, 1
        %s330 = scalar_lea.sflag [#allocation5], %s329
        %s331 = sand.u32 %s37, 1
        %s332 = smul.addr %s331, 8
        %s333 = scalar_lea.vmem [#allocation4], %s332
        // Predicated region
        $region53: #{tpu_custom_call.1} parent=51 // pred_check
          %p334 = pneg %p50
        $region54: #{tpu_custom_call.1} parent=51 // pred_check_branch
          %336 = sbr.rel (%p334) target = $region56
        $region55: #{tpu_custom_call.1} parent=51 // pred_region
          %338 = dma.done %s330, 128
        $region56: #{tpu_custom_call.1} parent=51 // pred_fallthru
          _
        %s339 = sand.u32 %s29, 1
        %s340 = scalar_lea.sflag [#allocation8], %s339
        %s341 = sand.u32 %s63, 1
        %s342 = smul.addr %s341, 8
        %s343 = scalar_lea.vmem [#allocation7], %s342
        // Predicated region
        $region57: #{tpu_custom_call.1} parent=51 // pred_check
          %p344 = pneg %p76
        $region58: #{tpu_custom_call.1} parent=51 // pred_check_branch
          %346 = sbr.rel (%p344) target = $region60
        $region59: #{tpu_custom_call.1} parent=51 // pred_region
          %348 = dma.done %s340, 128
        $region60: #{tpu_custom_call.1} parent=51 // pred_fallthru
          _
        // Predicated region
        $region61: #{tpu_custom_call.1} parent=51 // pred_check
          %p349 = pneg %p181
        $region62: #{tpu_custom_call.1} parent=51 // pred_check_branch
          %351 = sbr.rel (%p349) target = $region64
        $region63: #{tpu_custom_call.1} parent=51 // pred_region
          %353 = dma.done [#allocation8], 1024
        $region64: #{tpu_custom_call.1} parent=51 // pred_fallthru
          _
        %s354 = sand.u32 %s37, 1
        %s355 = scalar_lea.sflag [#allocation5], %s354
        %s356 = sand.u32 %s37, 1
        %s357 = smul.addr %s356, 8
        %s358 = scalar_lea.vmem [#allocation4], %s357
        %p359 = pneg %p50
        %p360 = pneg %p47
        %s361 = sand.u32 %s29, 1
        %s362 = scalar_lea.sflag [#allocation8], %s361
        %s363 = sand.u32 %s63, 1
        %s364 = smul.addr %s363, 8
        %s365 = scalar_lea.vmem [#allocation7], %s364
        %p366 = pneg %p76
        %p367 = pneg %p73
        %p368 = pneg %p97
        %p369 = pneg %p94
        %p370 = pneg %p118
        %p371 = pneg %p115
        %p372 = pneg %p139
        %p373 = pneg %p136
        %p374 = pneg %p160
        %p375 = pneg %p157
        %p376 = pneg %p181
        %p377 = pneg %p178
        %p378 = pneg %p202
        %p379 = pneg %p199
        %p380 = pneg %p228
        %p381 = pneg %p225
        %s382 = sand.u32 %s215, 1
        %s383 = scalar_lea.sflag [#allocation6], %s382
        %s384 = sand.u32 %s215, 1
        %s385 = smul.addr %s384, 32
        %s386 = scalar_lea.vmem [#allocation10], %s385
        %s387 = smul.u32 2, %s29
        %s388 = smul.u32 2, %s29
        %s389 = smul.u32 2, %s29
        %v391 = vld [vmem:[%s333] sm:$0xf]
        %v392 = vunpack.c.l.bf16 %v391
        %v393 = vld [vmem:[%s343] sm:$0xf]
        %v394 = vunpack.c.l.bf16 %v393
        %v395 = vsub.f32 %v392, %v394
        %v396 = vmul.f32 %v392, %v394
        %v397 = vadd.f32 %v395, %v396
        %s398 = scalar_lea.vmem %s333, 4 [#allocation4]
        %v399 = vld [vmem:[%s398] sm:$0xf]
        %v400 = vunpack.c.l.bf16 %v399
        %s401 = scalar_lea.vmem %s343, 4 [#allocation7]
        %v402 = vld [vmem:[%s401] sm:$0xf]
        %v403 = vunpack.c.l.bf16 %v402
        %v404 = vsub.f32 %v400, %v403
        %v405 = vmul.f32 %v400, %v403
        %v406 = vadd.f32 %v404, %v405
        %408 = vst [vmem:[#allocation1] ss:$2 sm:$0xff] %v397
        %v409 = vld.sshfl [vmem:[#allocation1] sm:$0xff pattern:$0x75316420]
        %v410 = vld.sshfl [vmem:[#allocation1 + $0x8] sm:$0xff pattern:$0x75316420]
        %414 = vst [vmem:[#allocation1] ss:$2 sm:$0xff] %v406
        %v415 = vld.sshfl [vmem:[#allocation1] sm:$0xff pattern:$0x75316420]
        %v416 = vld.sshfl [vmem:[#allocation1 + $0x8] sm:$0xff pattern:$0x75316420]
        %419 = vrot.lane.b32.xlu0 %v409, 17
        %v420 = vpop.permute.xlu0 %419
        %421 = vrot.lane.b32.xlu0 %v410, 17
        %v422 = vpop.permute.xlu0 %421
        %423 = vrot.lane.b32.xlu0 %v415, 17
        %v424 = vpop.permute.xlu0 %423
        %425 = vrot.lane.b32.xlu0 %v416, 17
        %v426 = vpop.permute.xlu0 %425
        %v427 = vlaneseq
        %v428 = vand.u32 %v427, 127
        %vm429 = vcmp.lt.s32.totalorder %v428, 17
        %v430 = vsel %vm429, %v424, %v426
        %v431 = vsel %vm429, %v422, %v424
        %v432 = vsel %vm429, %v420, %v422
        %v433 = vsel %vm429, %v426, %v420
        %v434 = vld [vmem:[#allocation9] ss:$8 sm:$0xf]
        %v436 = vperm.slane %v434, 0
        %v437 = vperm.slane %v434, 1
        %v438 = vperm.slane %v434, 2
        %v439 = vperm.slane %v434, 3
        %v444 = vmul.f32 %v433, %v436
        %v445 = vmul.f32 %v432, %v437
        %v446 = vmul.f32 %v431, %v438
        %v447 = vmul.f32 %v430, %v439
        %v448 = vpack.c.bf16 %v445, %v444
        %v449 = vpack.c.bf16 %v447, %v446
        %450 = vst [vmem:[#allocation2] sm:$0x33] %v448
        %451 = vst [vmem:[#allocation2 + $0x8] sm:$0x33] %v449
        %452 = vrot.lane.b32.xlu0 %v409, 16
        %v453 = vpop.permute.xlu0 %452
        %454 = vrot.lane.b32.xlu0 %v410, 16
        %v455 = vpop.permute.xlu0 %454
        %456 = vrot.lane.b32.xlu0 %v415, 16
        %v457 = vpop.permute.xlu0 %456
        %458 = vrot.lane.b32.xlu0 %v416, 16
        %v459 = vpop.permute.xlu0 %458
        %vm460 = vcmp.lt.s32.totalorder %v428, 16
        %v461 = vsel %vm460, %v457, %v459
        %v462 = vsel %vm460, %v455, %v457
        %v463 = vsel %vm460, %v453, %v455
        %v464 = vsel %vm460, %v459, %v453
        %s465 = scalar_lea.vmem [#allocation9], 1
        %v466 = vld [vmem:[%s465] ss:$8 sm:$0xf]
        %v468 = vperm.slane %v466, 0
        %v469 = vperm.slane %v466, 1
        %v470 = vperm.slane %v466, 2
        %v471 = vperm.slane %v466, 3
        %v476 = vmul.f32 %v464, %v468
        %v477 = vmul.f32 %v463, %v469
        %v478 = vmul.f32 %v462, %v470
        %v479 = vmul.f32 %v461, %v471
        %v480 = vpack.c.bf16 %v477, %v476
        %v481 = vpack.c.bf16 %v479, %v478
        %v484 = vrot.slane %v480, 6
        %v485 = vrot.slane %v481, 6
        %488 = vst [vmem:[#allocation2] sm:$0xcc] %v484
        %489 = vst [vmem:[#allocation2 + $0x8] sm:$0xcc] %v485
        %490 = vrot.lane.b32.xlu0 %v409, 15
        %v491 = vpop.permute.xlu0 %490
        %492 = vrot.lane.b32.xlu0 %v410, 15
        %v493 = vpop.permute.xlu0 %492
        %494 = vrot.lane.b32.xlu0 %v415, 15
        %v495 = vpop.permute.xlu0 %494
        %496 = vrot.lane.b32.xlu0 %v416, 15
        %v497 = vpop.permute.xlu0 %496
        %vm498 = vcmp.lt.s32.totalorder %v428, 15
        %v499 = vsel %vm498, %v495, %v497
        %v500 = vsel %vm498, %v493, %v495
        %v501 = vsel %vm498, %v491, %v493
        %v502 = vsel %vm498, %v497, %v491
        %s503 = scalar_lea.vmem [#allocation9], 2
        %v504 = vld [vmem:[%s503] ss:$8 sm:$0xf]
        %v506 = vperm.slane %v504, 0
        %v507 = vperm.slane %v504, 1
        %v508 = vperm.slane %v504, 2
        %v509 = vperm.slane %v504, 3
        %v514 = vmul.f32 %v502, %v506
        %v515 = vmul.f32 %v501, %v507
        %v516 = vmul.f32 %v500, %v508
        %v517 = vmul.f32 %v499, %v509
        %v518 = vpack.c.bf16 %v515, %v514
        %v519 = vpack.c.bf16 %v517, %v516
        %520 = vst [vmem:[#allocation2 + $0x10] sm:$0x33] %v518
        %521 = vst [vmem:[#allocation2 + $0x18] sm:$0x33] %v519
        %522 = vrot.lane.b32.xlu0 %v409, 1
        %v523 = vpop.permute.xlu0 %522
        %524 = vrot.lane.b32.xlu0 %v410, 1
        %v525 = vpop.permute.xlu0 %524
        %526 = vrot.lane.b32.xlu0 %v415, 1
        %v527 = vpop.permute.xlu0 %526
        %528 = vrot.lane.b32.xlu0 %v416, 1
        %v529 = vpop.permute.xlu0 %528
        %vm530 = vcmp.lt.s32.totalorder %v428, 1
        %v531 = vsel %vm530, %v527, %v529
        %v532 = vsel %vm530, %v525, %v527
        %v533 = vsel %vm530, %v523, %v525
        %v534 = vsel %vm530, %v529, %v523
        %s535 = scalar_lea.vmem [#allocation9], 3
        %v536 = vld [vmem:[%s535] ss:$8 sm:$0xf]
        %v538 = vperm.slane %v536, 0
        %v539 = vperm.slane %v536, 1
        %v540 = vperm.slane %v536, 2
        %v541 = vperm.slane %v536, 3
        %v546 = vmul.f32 %v534, %v538
        %v547 = vmul.f32 %v533, %v539
        %v548 = vmul.f32 %v532, %v540
        %v549 = vmul.f32 %v531, %v541
        %v550 = vpack.c.bf16 %v547, %v546
        %v551 = vpack.c.bf16 %v549, %v548
        %v554 = vrot.slane %v550, 6
        %v555 = vrot.slane %v551, 6
        %558 = vst [vmem:[#allocation2 + $0x10] sm:$0xcc] %v554
        %559 = vst [vmem:[#allocation2 + $0x18] sm:$0xcc] %v555
        %v560 = vpack.c.bf16 %v410, %v409
        %v561 = vpack.c.bf16 %v416, %v415
        %562 = vst [vmem:[#allocation2 + $0x20] sm:$0x33] %v560
        %563 = vst [vmem:[#allocation2 + $0x28] sm:$0x33] %v561
        %564 = vrot.lane.b32.xlu0 %v409, 127
        %v565 = vpop.permute.xlu0 %564
        %566 = vrot.lane.b32.xlu0 %v410, 127
        %v567 = vpop.permute.xlu0 %566
        %568 = vrot.lane.b32.xlu0 %v415, 127
        %v569 = vpop.permute.xlu0 %568
        %570 = vrot.lane.b32.xlu0 %v416, 127
        %v571 = vpop.permute.xlu0 %570
        %vm572 = vcmp.lt.s32.totalorder %v428, 127
        %v573 = vsel %vm572, %v569, %v571
        %v574 = vsel %vm572, %v567, %v569
        %v575 = vsel %vm572, %v565, %v567
        %v576 = vsel %vm572, %v571, %v565
        %s577 = scalar_lea.vmem [#allocation9], 5
        %v578 = vld [vmem:[%s577] ss:$8 sm:$0xf]
        %v580 = vperm.slane %v578, 0
        %v581 = vperm.slane %v578, 1
        %v582 = vperm.slane %v578, 2
        %v583 = vperm.slane %v578, 3
        %v588 = vmul.f32 %v575, %v580
        %v589 = vmul.f32 %v574, %v581
        %v590 = vmul.f32 %v573, %v582
        %v591 = vmul.f32 %v576, %v583
        %v592 = vpack.c.bf16 %v589, %v588
        %v593 = vpack.c.bf16 %v591, %v590
        %v596 = vrot.slane %v592, 6
        %v597 = vrot.slane %v593, 6
        %600 = vst [vmem:[#allocation2 + $0x20] sm:$0xcc] %v596
        %601 = vst [vmem:[#allocation2 + $0x28] sm:$0xcc] %v597
        %602 = vrot.lane.b32.xlu0 %v409, 113
        %v603 = vpop.permute.xlu0 %602
        %604 = vrot.lane.b32.xlu0 %v410, 113
        %v605 = vpop.permute.xlu0 %604
        %606 = vrot.lane.b32.xlu0 %v415, 113
        %v607 = vpop.permute.xlu0 %606
        %608 = vrot.lane.b32.xlu0 %v416, 113
        %v609 = vpop.permute.xlu0 %608
        %vm610 = vcmp.lt.s32.totalorder %v428, 113
        %v611 = vsel %vm610, %v607, %v609
        %v612 = vsel %vm610, %v605, %v607
        %v613 = vsel %vm610, %v603, %v605
        %v614 = vsel %vm610, %v609, %v603
        %s615 = scalar_lea.vmem [#allocation9], 6
        %v616 = vld [vmem:[%s615] ss:$8 sm:$0xf]
        %v618 = vperm.slane %v616, 0
        %v619 = vperm.slane %v616, 1
        %v620 = vperm.slane %v616, 2
        %v621 = vperm.slane %v616, 3
        %v626 = vmul.f32 %v613, %v618
        %v627 = vmul.f32 %v612, %v619
        %v628 = vmul.f32 %v611, %v620
        %v629 = vmul.f32 %v614, %v621
        %v630 = vpack.c.bf16 %v627, %v626
        %v631 = vpack.c.bf16 %v629, %v628
        %632 = vst [vmem:[#allocation2 + $0x30] sm:$0x33] %v630
        %633 = vst [vmem:[#allocation2 + $0x38] sm:$0x33] %v631
        %634 = vrot.lane.b32.xlu0 %v409, 112
        %v635 = vpop.permute.xlu0 %634
        %636 = vrot.lane.b32.xlu0 %v410, 112
        %v637 = vpop.permute.xlu0 %636
        %638 = vrot.lane.b32.xlu0 %v415, 112
        %v639 = vpop.permute.xlu0 %638
        %640 = vrot.lane.b32.xlu0 %v416, 112
        %v641 = vpop.permute.xlu0 %640
        %vm642 = vcmp.lt.s32.totalorder %v428, 112
        %v643 = vsel %vm642, %v639, %v641
        %v644 = vsel %vm642, %v637, %v639
        %v645 = vsel %vm642, %v635, %v637
        %v646 = vsel %vm642, %v641, %v635
        %s647 = scalar_lea.vmem [#allocation9], 7
        %v648 = vld [vmem:[%s647] ss:$8 sm:$0xf]
        %v650 = vperm.slane %v648, 0
        %v651 = vperm.slane %v648, 1
        %v652 = vperm.slane %v648, 2
        %v653 = vperm.slane %v648, 3
        %v658 = vmul.f32 %v645, %v650
        %v659 = vmul.f32 %v644, %v651
        %v660 = vmul.f32 %v643, %v652
        %v661 = vmul.f32 %v646, %v653
        %v662 = vpack.c.bf16 %v659, %v658
        %v663 = vpack.c.bf16 %v661, %v660
        %v666 = vrot.slane %v662, 6
        %v667 = vrot.slane %v663, 6
        %670 = vst [vmem:[#allocation2 + $0x30] sm:$0xcc] %v666
        %671 = vst [vmem:[#allocation2 + $0x38] sm:$0xcc] %v667
        %672 = vrot.lane.b32.xlu0 %v409, 111
        %v673 = vpop.permute.xlu0 %672
        %674 = vrot.lane.b32.xlu0 %v410, 111
        %v675 = vpop.permute.xlu0 %674
        %676 = vrot.lane.b32.xlu0 %v415, 111
        %v677 = vpop.permute.xlu0 %676
        %678 = vrot.lane.b32.xlu0 %v416, 111
        %v679 = vpop.permute.xlu0 %678
        %vm680 = vcmp.lt.s32.totalorder %v428, 111
        %v681 = vsel %vm680, %v677, %v679
        %v682 = vsel %vm680, %v675, %v677
        %v683 = vsel %vm680, %v673, %v675
        %v684 = vsel %vm680, %v679, %v673
        %s685 = scalar_lea.vmem [#allocation9], 32
        %v686 = vld [vmem:[%s685] ss:$8 sm:$0xf]
        %v688 = vperm.slane %v686, 0
        %v689 = vperm.slane %v686, 1
        %v690 = vperm.slane %v686, 2
        %v691 = vperm.slane %v686, 3
        %v696 = vmul.f32 %v683, %v688
        %v697 = vmul.f32 %v682, %v689
        %v698 = vmul.f32 %v681, %v690
        %v699 = vmul.f32 %v684, %v691
        %v700 = vpack.c.bf16 %v697, %v696
        %v701 = vpack.c.bf16 %v699, %v698
        %702 = vst [vmem:[#allocation2 + $0x40] sm:$0x33] %v700
        %703 = vst [vmem:[#allocation2 + $0x48] sm:$0x33] %v701
        %v704 = vld [vmem:[%s2] sm:$0xf]
        %v705 = vld [vmem:[#allocation2] sm:$0xff]
        %v706 = vld [vmem:[#allocation2 + $0x8] sm:$0xff]
        %v707 = vld [vmem:[#allocation2 + $0x10] sm:$0xff]
        %v708 = vld [vmem:[#allocation2 + $0x18] sm:$0xff]
        %v709 = vld [vmem:[#allocation2 + $0x20] sm:$0xff]
        %v710 = vld [vmem:[#allocation2 + $0x28] sm:$0xff]
        %v711 = vld [vmem:[#allocation2 + $0x30] sm:$0xff]
        %v712 = vld [vmem:[#allocation2 + $0x38] sm:$0xff]
        %v713 = vld [vmem:[#allocation2 + $0x40] sm:$0x33]
        %v714 = vld [vmem:[#allocation2 + $0x48] sm:$0x33]
        %v715 = vld [vmem:[%s5] sm:$0xff]
        %717 = vset.pattern.permute.xlu0 0
        %718 = vperm.xlu0 %717, %v715
        %v719 = vpop.permute.xlu0 %718
        %v731 = vunpack.c.l.b16 %v705
        %v732 = vunpack.c.h.b16 %v705
        %v733 = vunpack.c.l.b16 %v706
        %v734 = vunpack.c.h.b16 %v706
        %v735 = vunpack.c.l.b16 %v707
        %v736 = vunpack.c.h.b16 %v707
        %v737 = vunpack.c.l.b16 %v708
        %v738 = vunpack.c.h.b16 %v708
        %v739 = vunpack.c.l.b16 %v709
        %v740 = vunpack.c.h.b16 %v709
        %v741 = vunpack.c.l.b16 %v710
        %v742 = vunpack.c.h.b16 %v710
        %v743 = vunpack.c.l.b16 %v711
        %v744 = vunpack.c.h.b16 %v711
        %v745 = vunpack.c.l.b16 %v712
        %v746 = vunpack.c.h.b16 %v712
        %v747 = vunpack.c.l.b16 %v713
        %v748 = vunpack.c.h.b16 %v713
        %v749 = vunpack.c.l.b16 %v714
        %v750 = vunpack.c.h.b16 %v714
        %v751 = vpack.c.b16 %v735, %v731
        %v752 = vpack.c.b16 %v736, %v732
        %v753 = vpack.c.b16 %v737, %v733
        %v754 = vpack.c.b16 %v738, %v734
        %v755 = vpack.c.b16 %v743, %v739
        %v756 = vpack.c.b16 %v744, %v740
        %v757 = vpack.c.b16 %v745, %v741
        %v758 = vpack.c.b16 %v746, %v742
        %v759 = vpack.c.b16 %v747, %v747
        %v760 = vpack.c.b16 %v748, %v748
        %v761 = vpack.c.b16 %v749, %v749
        %v762 = vpack.c.b16 %v750, %v750
        %vm771 = vcmask 293888
        %v773 = vsel %vm771, %v704, 0
        %vm775 = vcmask 1041408
        %v777 = vsel %vm775, %v759, 0
        %v780 = vsel %vm775, %v760, 0
        %v783 = vsel %vm775, %v761, 0
        %v786 = vsel %vm775, %v762, 0
        %788 = vmatpush.bf16.msra.mxu0 0
        %789 = vmatpush.bf16.msra.mxu0 0
        %790 = vmatpush.bf16.msra.mxu0 0
        %791 = vmatpush.bf16.msra.mxu0 0
        %792 = vmatpush.bf16.msra.mxu0 0
        %793 = vmatpush.bf16.msra.mxu0 %v777
        %794 = vmatpush.bf16.msra.mxu0 %v755
        %795 = vmatpush.bf16.msra.mxu0 %v751
        %796 = vmatmul.bf16.gmra.mxu0 %v773
        %v797 = vpop.f32.mrf.mxu0
        %v798 = vadd.f32 %v719, %v797
        %v799 = vpop.f32.mrf.mxu0
        %800 = vdwg.mxu0
        %801 = vmatpush.bf16.msra.mxu0 0
        %802 = vmatpush.bf16.msra.mxu0 0
        %803 = vmatpush.bf16.msra.mxu0 0
        %804 = vmatpush.bf16.msra.mxu0 0
        %805 = vmatpush.bf16.msra.mxu0 0
        %806 = vmatpush.bf16.msra.mxu0 %v780
        %807 = vmatpush.bf16.msra.mxu0 %v756
        %808 = vmatpush.bf16.msra.mxu0 %v752
        %809 = vmatmul.bf16.gmra.mxu0 %v773
        %v810 = vpop.f32.mrf.mxu0
        %v811 = vadd.f32 %v719, %v810
        %v812 = vpop.f32.mrf.mxu0
        %813 = vdwg.mxu0
        %814 = vmatpush.bf16.msra.mxu0 0
        %815 = vmatpush.bf16.msra.mxu0 0
        %816 = vmatpush.bf16.msra.mxu0 0
        %817 = vmatpush.bf16.msra.mxu0 0
        %818 = vmatpush.bf16.msra.mxu0 0
        %819 = vmatpush.bf16.msra.mxu0 %v783
        %820 = vmatpush.bf16.msra.mxu0 %v757
        %821 = vmatpush.bf16.msra.mxu0 %v753
        %822 = vmatmul.bf16.gmra.mxu0 %v773
        %v823 = vpop.f32.mrf.mxu0
        %v824 = vadd.f32 %v719, %v823
        %v825 = vpop.f32.mrf.mxu0
        %826 = vdwg.mxu0
        %827 = vmatpush.bf16.msra.mxu0 0
        %828 = vmatpush.bf16.msra.mxu0 0
        %829 = vmatpush.bf16.msra.mxu0 0
        %830 = vmatpush.bf16.msra.mxu0 0
        %831 = vmatpush.bf16.msra.mxu0 0
        %832 = vmatpush.bf16.msra.mxu0 %v786
        %833 = vmatpush.bf16.msra.mxu0 %v758
        %834 = vmatpush.bf16.msra.mxu0 %v754
        %835 = vmatmul.bf16.gmra.mxu0 %v773
        %v836 = vpop.f32.mrf.mxu0
        %v837 = vadd.f32 %v719, %v836
        %v838 = vpop.f32.mrf.mxu0
        %839 = vdwg.mxu0
        %s840 = sld [smem:[#allocation3]]
        %vm841 = vcmp.ge.f32.partialorder %v798, 0.0
        %vm842 = vcmp.ge.f32.partialorder %v811, 0.0
        %vm843 = vcmp.ge.f32.partialorder %v824, 0.0
        %vm844 = vcmp.ge.f32.partialorder %v837, 0.0
        %v845 = vstv %s840
        %v846 = vmul.f32 %v845, %v798
        %v847 = vmul.f32 %v845, %v811
        %v848 = vmul.f32 %v845, %v824
        %v849 = vmul.f32 %v845, %v837
        %v850 = vsel %vm841, %v798, %v846
        %v851 = vsel %vm842, %v811, %v847
        %v852 = vsel %vm843, %v824, %v848
        %v853 = vsel %vm844, %v837, %v849
        %v854 = vadd.f32 %v850, %v851
        %855 = vadd.xlane.f32.xlu0 %v854
        %v856 = vpop.xlane.xlu0 %855
        %v857 = vmul.f32 %v856, 0.00390625
        %v858 = vmul.f32 %v850, %v850
        %v859 = vmul.f32 %v851, %v851
        %v860 = vadd.f32 %v858, %v859
        %861 = vadd.xlane.f32.xlu0 %v860
        %v862 = vpop.xlane.xlu0 %861
        %v863 = vmul.f32 %v862, 0.00390625
        %v864 = vmul.f32 %v857, %v857
        %v865 = vsub.f32 %v863, %v864
        %v866 = vmax.f32 %v865, 0.0
        %v867 = vsub.f32 %v850, %v857
        %v868 = vsub.f32 %v851, %v857
        %v869 = vadd.f32 %v866, 1e-05
        %v870 = vrsqrt.pop %v869
        %v871 = vmul.f32 %v870, %v869
        %v872 = vmul.f32 %v871, %v870
        %v873 = vmul.f32 0.5, %v872
        %v874 = vsub.f32 1.5, %v873
        %v875 = vmul.f32 %v870, %v874
        %vm876 = vweird.f32 %v869
        %vm877 = vweird.f32 %v870
        %vm878 = vmor %vm876, %vm877
        %v879 = vsel %vm878, %v870, %v875
        %v880 = vmul.f32 %v867, %v879
        %v881 = vmul.f32 %v868, %v879
        %v882 = vadd.f32 %v852, %v853
        %883 = vadd.xlane.f32.xlu0 %v882
        %v884 = vpop.xlane.xlu0 %883
        %v885 = vmul.f32 %v884, 0.00390625
        %v886 = vmul.f32 %v852, %v852
        %v887 = vmul.f32 %v853, %v853
        %v888 = vadd.f32 %v886, %v887
        %889 = vadd.xlane.f32.xlu0 %v888
        %v890 = vpop.xlane.xlu0 %889
        %v891 = vmul.f32 %v890, 0.00390625
        %v892 = vmul.f32 %v885, %v885
        %v893 = vsub.f32 %v891, %v892
        %v894 = vmax.f32 %v893, 0.0
        %v895 = vsub.f32 %v852, %v885
        %v896 = vsub.f32 %v853, %v885
        %v897 = vadd.f32 %v894, 1e-05
        %v898 = vrsqrt.pop %v897
        %v899 = vmul.f32 %v898, %v897
        %v900 = vmul.f32 %v899, %v898
        %v901 = vmul.f32 0.5, %v900
        %v902 = vsub.f32 1.5, %v901
        %v903 = vmul.f32 %v898, %v902
        %vm904 = vweird.f32 %v897
        %vm905 = vweird.f32 %v898
        %vm906 = vmor %vm904, %vm905
        %v907 = vsel %vm906, %v898, %v903
        %v908 = vmul.f32 %v895, %v907
        %v909 = vmul.f32 %v896, %v907
        %v910 = vld [vmem:[%s3] sm:$0x3]
        %v911 = vpack.c.bf16 %v880, %v880
        %v912 = vpack.c.bf16 %v881, %v881
        %v913 = vpack.c.bf16 %v908, %v908
        %v914 = vpack.c.bf16 %v909, %v909
        %vm915 = vcmask 64512
        %v917 = vsel %vm915, %v910, 0
        %vm919 = vcmask 1043456
        %v921 = vsel %vm919, %v911, 0
        %v924 = vsel %vm919, %v912, 0
        %v927 = vsel %vm919, %v913, 0
        %v930 = vsel %vm919, %v914, 0
        %932 = vmatpush.bf16.msra.mxu0 0
        %933 = vmatpush.bf16.msra.mxu0 0
        %934 = vmatpush.bf16.msra.mxu0 0
        %935 = vmatpush.bf16.msra.mxu0 0
        %936 = vmatpush.bf16.msra.mxu0 0
        %937 = vmatpush.bf16.msra.mxu0 0
        %938 = vmatpush.bf16.msra.mxu0 0
        %939 = vmatpush.bf16.msra.mxu0 %v921
        %940 = vmatmul.bf16.gmra.mxu0 %v917
        %v941 = vpop.f32.mrf.mxu0
        %v942 = vadd.f32 0.0, %v941
        %v943 = vpop.f32.mrf.mxu0
        %944 = vdwg.mxu0
        %945 = vmatpush.bf16.msra.mxu0 0
        %946 = vmatpush.bf16.msra.mxu0 0
        %947 = vmatpush.bf16.msra.mxu0 0
        %948 = vmatpush.bf16.msra.mxu0 0
        %949 = vmatpush.bf16.msra.mxu0 0
        %950 = vmatpush.bf16.msra.mxu0 0
        %951 = vmatpush.bf16.msra.mxu0 0
        %952 = vmatpush.bf16.msra.mxu0 %v924
        %953 = vmatmul.bf16.gmra.mxu0 %v917
        %v954 = vpop.f32.mrf.mxu0
        %v955 = vadd.f32 0.0, %v954
        %v956 = vpop.f32.mrf.mxu0
        %957 = vdwg.mxu0
        %958 = vmatpush.bf16.msra.mxu0 0
        %959 = vmatpush.bf16.msra.mxu0 0
        %960 = vmatpush.bf16.msra.mxu0 0
        %961 = vmatpush.bf16.msra.mxu0 0
        %962 = vmatpush.bf16.msra.mxu0 0
        %963 = vmatpush.bf16.msra.mxu0 0
        %964 = vmatpush.bf16.msra.mxu0 0
        %965 = vmatpush.bf16.msra.mxu0 %v927
        %966 = vmatmul.bf16.gmra.mxu0 %v917
        %v967 = vpop.f32.mrf.mxu0
        %v968 = vadd.f32 0.0, %v967
        %v969 = vpop.f32.mrf.mxu0
        %970 = vdwg.mxu0
        %971 = vmatpush.bf16.msra.mxu0 0
        %972 = vmatpush.bf16.msra.mxu0 0
        %973 = vmatpush.bf16.msra.mxu0 0
        %974 = vmatpush.bf16.msra.mxu0 0
        %975 = vmatpush.bf16.msra.mxu0 0
        %976 = vmatpush.bf16.msra.mxu0 0
        %977 = vmatpush.bf16.msra.mxu0 0
        %978 = vmatpush.bf16.msra.mxu0 %v930
        %979 = vmatmul.bf16.gmra.mxu0 %v917
        %v980 = vpop.f32.mrf.mxu0
        %v981 = vadd.f32 0.0, %v980
        %v982 = vpop.f32.mrf.mxu0
        %983 = vdwg.mxu0
        %v984 = vsel %vm775, %v942, -inf
        %v985 = vsel %vm775, %v955, -inf
        %v986 = vmax.f32 %v984, %v985
        %987 = vmax.xlane.f32.xlu0 %v986
        %v988 = vpop.xlane.xlu0 %987
        %v989 = vsub.f32 %v942, %v988
        %v990 = vsub.f32 %v955, %v988
        %v991 = vmul.f32 %v989, 1.442695
        %v992 = vpow.pop %v991
        %v993 = vmul.f32 %v990, 1.442695
        %v994 = vpow.pop %v993
        %v997 = vrot.slane %v942, 2
        %v998 = vrot.slane %v955, 2
        %v1001 = vmul.f32 %v992, %v997
        %v1002 = vmul.f32 %v994, %v998
        %v1003 = vsel %vm775, %v1001, 0.0
        %v1004 = vsel %vm775, %v1002, 0.0
        %v1005 = vadd.f32 %v1003, %v1004
        %1006 = vadd.xlane.f32.xlu0 %v1005
        %v1007 = vpop.xlane.xlu0 %1006
        %v1008 = vsel %vm775, %v992, 0.0
        %v1009 = vsel %vm775, %v994, 0.0
        %v1010 = vadd.f32 %v1008, %v1009
        %1011 = vadd.xlane.f32.xlu0 %v1010
        %v1012 = vpop.xlane.xlu0 %1011
        %v1013 = vrcp.pop %v1012
        %v1014 = vmul.f32 %v1007, %v1013
        %v1015 = vpack.c.bf16 %v1014, %v1014
        %v1016 = vld [vmem:[%s4] sm:$0xf]
        %1017 = vrot.lane.b32.xlu0 %v715, 127
        %v1018 = vpop.permute.xlu0 %1017
        %vm1020 = vcmask 15360
        %v1022 = vsel %vm1020, %v1016, 0
        %vm1024 = vcmask 1040384
        %v1026 = vsel %vm1024, %v1015, 0
        %1028 = vmatpush.bf16.msra.mxu0 0
        %1029 = vmatpush.bf16.msra.mxu0 0
        %1030 = vmatpush.bf16.msra.mxu0 0
        %1031 = vmatpush.bf16.msra.mxu0 0
        %1032 = vmatpush.bf16.msra.mxu0 0
        %1033 = vmatpush.bf16.msra.mxu0 0
        %1034 = vmatpush.bf16.msra.mxu0 0
        %1035 = vmatpush.bf16.msra.mxu0 %v1026
        %1036 = vmatmul.bf16.gmra.mxu0 %v1022
        %v1037 = vpop.f32.mrf.mxu0
        %v1038 = vadd.f32 %v1018, %v1037
        %v1039 = vpop.f32.mrf.mxu0
        %1040 = vdwg.mxu0
        %1042 = vset.pattern.permute.xlu0 0
        %1043 = vperm.xlu0 %1042, %v1038
        %v1044 = vpop.permute.xlu0 %1043
        %v1046 = vadd.f32 %v880, %v1044
        %v1047 = vadd.f32 %v881, %v1044
        %1048 = vst [vmem:[%s386] sm:$0xff] %v1046
        %1049 = vst [vmem:[%s386 + $0x8] sm:$0xff] %v1047
        %v1050 = vsel %vm775, %v968, -inf
        %v1051 = vsel %vm775, %v981, -inf
        %v1052 = vmax.f32 %v1050, %v1051
        %1053 = vmax.xlane.f32.xlu0 %v1052
        %v1054 = vpop.xlane.xlu0 %1053
        %v1055 = vsub.f32 %v968, %v1054
        %v1056 = vsub.f32 %v981, %v1054
        %v1057 = vmul.f32 %v1055, 1.442695
        %v1058 = vpow.pop %v1057
        %v1059 = vmul.f32 %v1056, 1.442695
        %v1060 = vpow.pop %v1059
        %v1063 = vrot.slane %v968, 2
        %v1064 = vrot.slane %v981, 2
        %v1067 = vmul.f32 %v1058, %v1063
        %v1068 = vmul.f32 %v1060, %v1064
        %v1069 = vsel %vm775, %v1067, 0.0
        %v1070 = vsel %vm775, %v1068, 0.0
        %v1071 = vadd.f32 %v1069, %v1070
        %1072 = vadd.xlane.f32.xlu0 %v1071
        %v1073 = vpop.xlane.xlu0 %1072
        %v1074 = vsel %vm775, %v1058, 0.0
        %v1075 = vsel %vm775, %v1060, 0.0
        %v1076 = vadd.f32 %v1074, %v1075
        %1077 = vadd.xlane.f32.xlu0 %v1076
        %v1078 = vpop.xlane.xlu0 %1077
        %v1079 = vrcp.pop %v1078
        %v1080 = vmul.f32 %v1073, %v1079
        %v1081 = vpack.c.bf16 %v1080, %v1080
        %v1082 = vld [vmem:[%s4] sm:$0xf]
        %v1083 = vld [vmem:[%s5] sm:$0xff]
        %1085 = vrot.lane.b32.xlu0 %v1083, 127
        %v1086 = vpop.permute.xlu0 %1085
        %v1089 = vsel %vm1020, %v1082, 0
        %v1092 = vsel %vm1024, %v1081, 0
        %1094 = vmatpush.bf16.msra.mxu0 0
        %1095 = vmatpush.bf16.msra.mxu0 0
        %1096 = vmatpush.bf16.msra.mxu0 0
        %1097 = vmatpush.bf16.msra.mxu0 0
        %1098 = vmatpush.bf16.msra.mxu0 0
        %1099 = vmatpush.bf16.msra.mxu0 0
        %1100 = vmatpush.bf16.msra.mxu0 0
        %1101 = vmatpush.bf16.msra.mxu0 %v1092
        %1102 = vmatmul.bf16.gmra.mxu0 %v1089
        %v1103 = vpop.f32.mrf.mxu0
        %v1104 = vadd.f32 %v1086, %v1103
        %v1105 = vpop.f32.mrf.mxu0
        %1106 = vdwg.mxu0
        %1108 = vset.pattern.permute.xlu0 0
        %1109 = vperm.xlu0 %1108, %v1104
        %v1110 = vpop.permute.xlu0 %1109
        %v1112 = vadd.f32 %v908, %v1110
        %v1113 = vadd.f32 %v909, %v1110
        %s1114 = scalar_lea.vmem %s386, 16 [#allocation10]
        %1115 = vst [vmem:[%s1114] sm:$0xff] %v1112
        %1116 = vst [vmem:[%s1114 + $0x8] sm:$0xff] %v1113
        %s1117 = sand.u32 %s215, 1
        %s1118 = scalar_lea.sflag [#allocation6], %s1117
        %s1119 = sand.u32 %s215, 1
        %s1120 = smul.addr %s1119, 32
        %s1121 = scalar_lea.vmem [#allocation10], %s1120
        // Predicated region
        $region65: #{tpu_custom_call.1} parent=51 // pred_check
          %p1122 = pneg %p225
        $region66: #{tpu_custom_call.1} parent=51 // pred_check_branch
          %1124 = sbr.rel (%p1122) target = $region68
        $region67: #{tpu_custom_call.1} parent=51 // pred_region
          %s1125 = smul.u32 2, %s29
          %1127 = vsyncadd %s1118, 0
          %s1128 = smul.addr %s1125, 2
          %s1129 = smul.addr %s1128, 8
          %s1130 = scalar_lea.hbm %s8, %s1129
          %s1131 = sshll.u32 %s1121, 4
          %s1132 = int_to_ptr.vmem [resolvable:$true] %s1131
          %s1133 = sshll.u32 %s1130, 4
          %s1134 = int_to_ptr.hbm [resolvable:$true] %s1133
          %1139 = dma.vmem_to_hbm [thread:$0]  %s1132, 512, %s1134, %s1118, 256, 256, 16
        $region68: #{tpu_custom_call.1} parent=51 // pred_fallthru
          _
      $region52: #{tpu_custom_call.1} parent=5 // pred_fallthru
        _
      %p1140 = scmp.le.s32.totalorder 2, %s24
      // Predicated region
      $region69: #{tpu_custom_call.1} parent=5 // pred_check
        %p1141 = pneg %p1140
      $region70: #{tpu_custom_call.1} parent=5 // pred_check_branch
        %1143 = sbr.rel (%p1141) target = $region72
      $region71: #{tpu_custom_call.1} parent=5 // pred_region
        %s1144 = ssub.s32 %s24, 2
        // Predicated region
        $region73: #{tpu_custom_call.1} parent=71 // pred_check
          %p1145 = pneg %p231
        $region74: #{tpu_custom_call.1} parent=71 // pred_check_branch
          %1147 = sbr.rel (%p1145) target = $region76
        $region75: #{tpu_custom_call.1} parent=71 // pred_region
          %s1148 = sand.u32 %s216, 1
          %s1149 = scalar_lea.sflag [#allocation6], %s1148
          %s1150 = sand.u32 %s216, 1
          %s1151 = smul.addr %s1150, 32
          %s1152 = scalar_lea.vmem [#allocation10], %s1151
          %1154 = dma.done %s1149, 512
        $region76: #{tpu_custom_call.1} parent=71 // pred_fallthru
          _
      $region72: #{tpu_custom_call.1} parent=5 // pred_fallthru
        _
    $region6: #{tpu_custom_call.1} parent=1 // loop_footer
      %s28 = sadd.s32 1, %s24
    $region7: #{tpu_custom_call.1} parent=1 // loop_footer_branch
      %23 = sbr.rel target = $region3
    $region8: #{tpu_custom_call.1} parent=1 // loop_exit
      _
    %1155 = vsyncpa [#allocation5], 1
    %s1156 = scalar_lea.sflag [#allocation5], 1
    %1157 = vsyncpa %s1156, 1
    %1158 = vsyncpa [#allocation8], 1
    %s1159 = scalar_lea.sflag [#allocation8], 1
    %1160 = vsyncpa %s1159, 1
    %1161 = vsyncpa [#allocation6], 1
    %s1162 = scalar_lea.sflag [#allocation6], 1
    %1163 = vsyncpa %s1162, 1

</llo_original>
